<compile_context>
chip_gen: v5e
topology: v5e:2x2
jax: 0.10.0
libtpu: 0.0.40
codegen_flags: <defaults>
</compile_context>

<pallas_src>
import functools

import jax
import jax.numpy as jnp
from jax.experimental import pallas as pl
from jax.experimental.pallas import tpu as pltpu

EPS = 1e-5  # PyTorch LayerNorm default


# ------------------------------ kernel helpers -------------------------------

def _layernorm(x, gamma, beta):
    # x: (R, D); gamma/beta: (1, D)
    mean = jnp.mean(x, axis=-1, keepdims=True)
    var = jnp.mean((x - mean) ** 2, axis=-1, keepdims=True)
    return (x - mean) * jax.lax.rsqrt(var + EPS) * gamma + beta


def _attention(q, k, v, tb, s_q, s_kv, num_heads):
    """Scaled-dot-product attention restricted to per-element blocks.

    q: (tb*s_q, D) already scaled by 1/sqrt(dh); k, v: (tb*s_kv, D).
    Returns the per-head contexts packed back to (tb*s_q, D) so the caller can
    run a single output-projection matmul over all rows.
    """
    D = q.shape[-1]
    dh = D // num_heads
    ctx_rows = []
    for b in range(tb):                       # static unroll over batch block
        qb = q[b * s_q:(b + 1) * s_q, :]
        kb = k[b * s_kv:(b + 1) * s_kv, :]
        vb = v[b * s_kv:(b + 1) * s_kv, :]
        heads = []
        for h in range(num_heads):            # static unroll, num_heads small
            sl = slice(h * dh, (h + 1) * dh)
            s = jnp.dot(qb[:, sl], kb[:, sl].T,
                        preferred_element_type=jnp.float32)       # (s_q, s_kv)
            s = s - jnp.max(s, axis=-1, keepdims=True)
            e = jnp.exp(s)
            # EUP reciprocal instead of a VALU divide for the normalizer.
            p = e * pl.reciprocal(jnp.sum(e, axis=-1, keepdims=True),
                                  approx=True)
            heads.append(jnp.dot(p, vb[:, sl],
                                 preferred_element_type=jnp.float32))
        ctx_rows.append(jnp.concatenate(heads, axis=-1))          # (s_q, D)
    return jnp.concatenate(ctx_rows, axis=0) if tb > 1 else ctx_rows[0]


# ------------------------------- fused kernel --------------------------------

def timexer_kernel(tok_ref, v_ref,
                   s_w, s_b, s_wo, s_bo,
                   c_w, c_b, c_wo, c_bo,
                   ln_g, ln_b,
                   f_ln_g, f_ln_b, f_w1, f_b1, f_w2, f_b2,
                   out_ref, *, num_heads):
    TB, S, D = tok_ref.shape          # S = P + 1 (patch tokens + global token)
    E = v_ref.shape[1]
    M = TB * S
    dh = D // num_heads
    scale = 1.0 / float(dh) ** 0.5

    x = tok_ref[...].astype(jnp.float32).reshape(M, D)            # (M, D)

    # ---- self attention: QKV + out-proj batched over all M rows --------------
    q = (jnp.dot(x, s_w[0], preferred_element_type=jnp.float32) + s_b[0]) * scale
    k = jnp.dot(x, s_w[1], preferred_element_type=jnp.float32) + s_b[1]
    v = jnp.dot(x, s_w[2], preferred_element_type=jnp.float32) + s_b[2]
    ctx = _attention(q, k, v, TB, S, S, num_heads)                # (M, D)
    attn = jnp.dot(ctx, s_wo[...], preferred_element_type=jnp.float32) + s_bo[...]

    tok_ln = _layernorm(x + attn, ln_g[...], ln_b[...])           # (M, D)

    # ---- cross attention: the TB global rows query the exogenous tokens ------
    tok3 = tok_ln.reshape(TB, S, D)
    g_q = tok3[:, S - 1:S, :].reshape(TB, D)                      # (TB, D)
    xv = v_ref[...].astype(jnp.float32).reshape(TB * E, D)        # (TB*E, D)
    qg = (jnp.dot(g_q, c_w[0], preferred_element_type=jnp.float32) + c_b[0]) * scale
    kg = jnp.dot(xv, c_w[1], preferred_element_type=jnp.float32) + c_b[1]
    vg = jnp.dot(xv, c_w[2], preferred_element_type=jnp.float32) + c_b[2]
    ctx_g = _attention(qg, kg, vg, TB, 1, E, num_heads)           # (TB, D)
    cross = jnp.dot(ctx_g, c_wo[...], preferred_element_type=jnp.float32) + c_bo[...]
    g_ln = _layernorm(g_q + cross, ln_g[...], ln_b[...])          # (TB, D)

    # ---- splice the cross-attended global token back in-register -------------
    row_id = jax.lax.broadcasted_iota(jnp.int32, (TB, S, D), 1)
    g_bcast = jnp.broadcast_to(g_ln[:, None, :], (TB, S, D))
    merged = jnp.where(row_id == S - 1, g_bcast, tok3).reshape(M, D)

    # ---- shared FFN on both streams, batched as one (M, D) matmul chain ------
    h = _layernorm(merged, f_ln_g[...], f_ln_b[...])
    h = jnp.maximum(
        jnp.dot(h, f_w1[...], preferred_element_type=jnp.float32) + f_b1[...], 0.0)
    out = jnp.dot(h, f_w2[...], preferred_element_type=jnp.float32) + f_b2[...]

    # Single dense (TB, S, D) write; wrapper slices patch/global streams.
    out_ref[...] = out.reshape(TB, S, D).astype(out_ref.dtype)


# ----------------------------- pallas_call glue -------------------------------

def _rep(shape):
    # Whole-array block (weights / biases), same block for every grid step.
    n = len(shape)
    return pl.BlockSpec(shape, lambda b, _n=n: (0,) * _n)


def _pick_batch_block(batch, rows_per_elem):
    """Batch block per grid step: push the matmul M dimension toward 128 rows,
    but keep >= 2 grid steps whenever possible (v7x has 2 TensorCores)."""
    divisors = [d for d in range(1, batch + 1) if batch % d == 0]
    target = max(1, pl.cdiv(128, rows_per_elem))
    tb = max([d for d in divisors if d <= target] or [1])
    if batch // tb < 2:
        smaller = [d for d in divisors if batch // d >= 2]
        if smaller:
            tb = max(smaller)
    return tb


def timexer_block(params, p_en, g_en, v_ex, *, num_heads, batch_block=None):
    B, P, D = p_en.shape
    E = v_ex.shape[1]
    S = P + 1

    # Pre-concatenate [patch ; global] once in the wrapper -> one dense DMA.
    tokens = jnp.concatenate([p_en, g_en[:, None, :]], axis=1)    # (B, S, D)

    TB = batch_block if batch_block is not None else _pick_batch_block(B, S)
    assert B % TB == 0, f"batch {B} not divisible by batch block {TB}"

    def attn_args(p):
        wq, wk, wv = jnp.split(p["in_proj_weight"], 3, axis=0)    # (D, D) each
        bq, bk, bv = jnp.split(p["in_proj_bias"], 3, axis=0)
        w = jnp.stack([wq.T, wk.T, wv.T], axis=0)                 # (3, D, D)
        b = jnp.stack([bq, bk, bv], axis=0).reshape(3, 1, D)      # (3, 1, D)
        return (w, b, p["out_proj_weight"].T, p["out_proj_bias"].reshape(1, D))

    f = params["ffn"]
    args = (tokens, v_ex,
            *attn_args(params["self_attn"]),
            *attn_args(params["cross_attn"]),
            params["ln_g"].reshape(1, D), params["ln_b"].reshape(1, D),
            f["ln_g"].reshape(1, D), f["ln_b"].reshape(1, D),
            f["w1"].T, f["b1"].reshape(1, D),
            f["w2"].T, f["b2"].reshape(1, D))

    in_specs = (
        pl.BlockSpec((TB, S, D), lambda b: (b, 0, 0)),            # tokens
        pl.BlockSpec((TB, E, D), lambda b: (b, 0, 0)),            # v_ex
        _rep((3, D, D)), _rep((3, 1, D)), _rep((D, D)), _rep((1, D)),  # self-attn
        _rep((3, D, D)), _rep((3, 1, D)), _rep((D, D)), _rep((1, D)),  # cross-attn
        _rep((1, D)), _rep((1, D)),                                    # shared LN
        _rep((1, D)), _rep((1, D)),                                    # FFN LN
        _rep((D, D)), _rep((1, D)), _rep((D, D)), _rep((1, D)),        # FFN linears
    )
    out_specs = pl.BlockSpec((TB, S, D), lambda b: (b, 0, 0))

    out = pl.pallas_call(
        functools.partial(timexer_kernel, num_heads=num_heads),
        out_shape=jax.ShapeDtypeStruct((B, S, D), p_en.dtype),
        grid=(B // TB,),
        in_specs=in_specs,
        out_specs=out_specs,
        compiler_params=pltpu.CompilerParams(
            dimension_semantics=("parallel",),
            vmem_limit_bytes=32 * 1024 * 1024),
    )(*args)

    # Lane/row-dense combined output; split streams outside the kernel.
    return out[:, :P, :], out[:, P, :]


# ---------------------------- parameter handling ------------------------------

def init_params(key, embed_dim):
    D = embed_dim
    ks = jax.random.split(key, 12)
    n = lambda k, shape: (jax.random.normal(k, shape, jnp.float32) * 0.1)
    params = {
        "self_attn": {
            "in_proj_weight": n(ks[0], (3 * D, D)),
            "in_proj_bias": n(ks[1], (3 * D,)),
            "out_proj_weight": n(ks[2], (D, D)),
            "out_proj_bias": n(ks[3], (D,)),
        },
        "cross_attn": {
            "in_proj_weight": n(ks[4], (3 * D, D)),
            "in_proj_bias": n(ks[5], (3 * D,)),
            "out_proj_weight": n(ks[6], (D, D)),
            "out_proj_bias": n(ks[7], (D,)),
        },
        "ffn": {
            "ln_g": jnp.ones((D,), jnp.float32),
            "ln_b": jnp.zeros((D,), jnp.float32),
            "w1": n(ks[8], (D, D)),
            "b1": n(ks[9], (D,)),
            "w2": n(ks[10], (D, D)),
            "b2": n(ks[11], (D,)),
        },
        "ln_g": jnp.ones((D,), jnp.float32),
        "ln_b": jnp.zeros((D,), jnp.float32),
    }
    return params


# ------------------------------ pure-JAX reference -----------------------------

def _ln_ref(x, g, b):
    m = jnp.mean(x, axis=-1, keepdims=True)
    v = jnp.mean((x - m) ** 2, axis=-1, keepdims=True)
    return (x - m) * jax.lax.rsqrt(v + EPS) * g + b


def _mha_ref(x, kv, p, num_heads):
    B, Sq, D = x.shape
    Skv = kv.shape[1]
    dh = D // num_heads
    wq, wk, wv = jnp.split(p["in_proj_weight"], 3, axis=0)
    bq, bk, bv = jnp.split(p["in_proj_bias"], 3, axis=0)
    q = (x @ wq.T + bq).reshape(B, Sq, num_heads, dh).transpose(0, 2, 1, 3)
    k = (kv @ wk.T + bk).reshape(B, Skv, num_heads, dh).transpose(0, 2, 1, 3)
    v = (kv @ wv.T + bv).reshape(B, Skv, num_heads, dh).transpose(0, 2, 1, 3)
    s = jnp.einsum("bhqd,bhkd->bhqk", q, k) / jnp.sqrt(jnp.float32(dh))
    a = jax.nn.softmax(s, axis=-1)
    ctx = jnp.einsum("bhqk,bhkd->bhqd", a, v).transpose(0, 2, 1, 3).reshape(B, Sq, D)
    return ctx @ p["out_proj_weight"].T + p["out_proj_bias"]


def timexer_block_ref(params, p_en, g_en, v_ex, *, num_heads):
    f = params["ffn"]
    ffn_ref = lambda x: jnp.maximum(
        _ln_ref(x, f["ln_g"], f["ln_b"]) @ f["w1"].T + f["b1"], 0.0) @ f["w2"].T + f["b2"]
    tokens = jnp.concatenate([p_en, g_en[:, None, :]], axis=1)
    attn_out = _mha_ref(tokens, tokens, params["self_attn"], num_heads)
    tokens = _ln_ref(tokens + attn_out, params["ln_g"], params["ln_b"])
    p_new, g_new = tokens[:, :-1, :], tokens[:, -1, :]
    cross = _mha_ref(g_new[:, None, :], v_ex, params["cross_attn"], num_heads)
    g_new = _ln_ref(g_new + cross[:, 0, :], params["ln_g"], params["ln_b"])
    return ffn_ref(p_new), ffn_ref(g_new)


# ------------------------------------ main -------------------------------------

if __name__ == "__main__":
    B, P, E, D, H = 2, 7, 8, 32, 4   # batch, patch tokens, exo tokens, embed, heads

    key = jax.random.PRNGKey(0)
    k_par, k_p, k_g, k_v = jax.random.split(key, 4)
    params = init_params(k_par, D)

    p_en = jax.random.normal(k_p, (B, P, D), jnp.float32)
    g_en = jax.random.normal(k_g, (B, D), jnp.float32)
    v_ex = jax.random.normal(k_v, (B, E, D), jnp.float32)

    p_out, g_out = timexer_block(params, p_en, g_en, v_ex, num_heads=H)
    jax.block_until_ready((p_out, g_out))

    p_ref, g_ref = timexer_block_ref(params, p_en, g_en, v_ex, num_heads=H)
    assert p_out.shape == (B, P, D) and g_out.shape == (B, D)
    assert jnp.allclose(p_out, p_ref, rtol=1e-2, atol=1e-2)
    assert jnp.allclose(g_out, g_ref, rtol=1e-2, atol=1e-2)

    print("KERNEL_OK")
</pallas_src>

<mosaic_0001>
module attributes {stable_mosaic.version = 11 : i64} {
  func.func @timexer_kernel(%arg0: i32, %arg1: memref<1x8x32xf32, #tpu.memory_space<vmem>>, %arg2: memref<1x8x32xf32, #tpu.memory_space<vmem>>, %arg3: memref<3x32x32xf32, #tpu.memory_space<vmem>>, %arg4: memref<3x1x32xf32, #tpu.memory_space<vmem>>, %arg5: memref<32x32xf32, #tpu.memory_space<vmem>>, %arg6: memref<1x32xf32, #tpu.memory_space<vmem>>, %arg7: memref<3x32x32xf32, #tpu.memory_space<vmem>>, %arg8: memref<3x1x32xf32, #tpu.memory_space<vmem>>, %arg9: memref<32x32xf32, #tpu.memory_space<vmem>>, %arg10: memref<1x32xf32, #tpu.memory_space<vmem>>, %arg11: memref<1x32xf32, #tpu.memory_space<vmem>>, %arg12: memref<1x32xf32, #tpu.memory_space<vmem>>, %arg13: memref<1x32xf32, #tpu.memory_space<vmem>>, %arg14: memref<1x32xf32, #tpu.memory_space<vmem>>, %arg15: memref<32x32xf32, #tpu.memory_space<vmem>>, %arg16: memref<1x32xf32, #tpu.memory_space<vmem>>, %arg17: memref<32x32xf32, #tpu.memory_space<vmem>>, %arg18: memref<1x32xf32, #tpu.memory_space<vmem>>, %arg19: memref<1x8x32xf32, #tpu.memory_space<vmem>>) attributes {dimension_semantics = [#tpu.dimension_semantics<parallel>], iteration_bounds = array<i64: 2>, scalar_prefetch = 0 : i64, scratch_operands = 0 : i64, tpu.core_type = #tpu.core_type<tc>, window_params = [{transform_indices = @transform_0, window_bounds = array<i64: 1, 8, 32>}, {transform_indices = @transform_1, window_bounds = array<i64: 1, 8, 32>}, {pipeline_mode = #tpu.pipeline_mode<synchronous>, transform_indices = @transform_2, window_bounds = array<i64: 3, 32, 32>}, {pipeline_mode = #tpu.pipeline_mode<synchronous>, transform_indices = @transform_3, window_bounds = array<i64: 3, 1, 32>}, {pipeline_mode = #tpu.pipeline_mode<synchronous>, transform_indices = @transform_4, window_bounds = array<i64: 32, 32>}, {pipeline_mode = #tpu.pipeline_mode<synchronous>, transform_indices = @transform_5, window_bounds = array<i64: 1, 32>}, {pipeline_mode = #tpu.pipeline_mode<synchronous>, transform_indices = @transform_6, window_bounds = array<i64: 3, 32, 32>}, {pipeline_mode = #tpu.pipeline_mode<synchronous>, transform_indices = @transform_7, window_bounds = array<i64: 3, 1, 32>}, {pipeline_mode = #tpu.pipeline_mode<synchronous>, transform_indices = @transform_8, window_bounds = array<i64: 32, 32>}, {pipeline_mode = #tpu.pipeline_mode<synchronous>, transform_indices = @transform_9, window_bounds = array<i64: 1, 32>}, {pipeline_mode = #tpu.pipeline_mode<synchronous>, transform_indices = @transform_10, window_bounds = array<i64: 1, 32>}, {pipeline_mode = #tpu.pipeline_mode<synchronous>, transform_indices = @transform_11, window_bounds = array<i64: 1, 32>}, {pipeline_mode = #tpu.pipeline_mode<synchronous>, transform_indices = @transform_12, window_bounds = array<i64: 1, 32>}, {pipeline_mode = #tpu.pipeline_mode<synchronous>, transform_indices = @transform_13, window_bounds = array<i64: 1, 32>}, {pipeline_mode = #tpu.pipeline_mode<synchronous>, transform_indices = @transform_14, window_bounds = array<i64: 32, 32>}, {pipeline_mode = #tpu.pipeline_mode<synchronous>, transform_indices = @transform_15, window_bounds = array<i64: 1, 32>}, {pipeline_mode = #tpu.pipeline_mode<synchronous>, transform_indices = @transform_16, window_bounds = array<i64: 32, 32>}, {pipeline_mode = #tpu.pipeline_mode<synchronous>, transform_indices = @transform_17, window_bounds = array<i64: 1, 32>}, {transform_indices = @transform_18, window_bounds = array<i64: 1, 8, 32>}]} {
    %c0 = arith.constant 0 : index
    %c0_0 = arith.constant 0 : index
    %c0_1 = arith.constant 0 : index
    %0 = vector.load %arg1[%c0, %c0_0, %c0_1] : memref<1x8x32xf32, #tpu.memory_space<vmem>>, vector<1x8x32xf32>
    %1 = vector.shape_cast %0 : vector<1x8x32xf32> to vector<8x32xf32>
    %c0_2 = arith.constant 0 : index
    %c0_3 = arith.constant 0 : index
    %c0_4 = arith.constant 0 : index
    %2 = vector.load %arg3[%c0_2, %c0_3, %c0_4] : memref<3x32x32xf32, #tpu.memory_space<vmem>>, vector<1x32x32xf32>
    %3 = vector.shape_cast %2 : vector<1x32x32xf32> to vector<32x32xf32>
    %cst = arith.constant dense<0.000000e+00> : vector<8x32xf32>
    %4 = tpu.matmul %1, %3, %cst {dimension_numbers = #tpu.dot_dimension_numbers<[1], [0], [0], [1], [0, 0, 1, 1], [], []>} : vector<8x32xf32>, vector<32x32xf32>, vector<8x32xf32> -> vector<8x32xf32>
    %c0_5 = arith.constant 0 : index
    %c0_6 = arith.constant 0 : index
    %c0_7 = arith.constant 0 : index
    %5 = vector.load %arg4[%c0_5, %c0_6, %c0_7] : memref<3x1x32xf32, #tpu.memory_space<vmem>>, vector<1x1x32xf32>
    %6 = vector.shape_cast %5 : vector<1x1x32xf32> to vector<1x32xf32>
    %7 = vector.broadcast %6 : vector<1x32xf32> to vector<8x32xf32>
    %8 = arith.addf %4, %7 : vector<8x32xf32>
    %cst_8 = arith.constant 0.353553385 : f32
    %9 = vector.broadcast %cst_8 : f32 to vector<8x32xf32>
    %10 = arith.mulf %8, %9 : vector<8x32xf32>
    %c1 = arith.constant 1 : index
    %c0_9 = arith.constant 0 : index
    %c0_10 = arith.constant 0 : index
    %11 = vector.load %arg3[%c1, %c0_9, %c0_10] : memref<3x32x32xf32, #tpu.memory_space<vmem>>, vector<1x32x32xf32>
    %12 = vector.shape_cast %11 : vector<1x32x32xf32> to vector<32x32xf32>
    %cst_11 = arith.constant dense<0.000000e+00> : vector<8x32xf32>
    %13 = tpu.matmul %1, %12, %cst_11 {dimension_numbers = #tpu.dot_dimension_numbers<[1], [0], [0], [1], [0, 0, 1, 1], [], []>} : vector<8x32xf32>, vector<32x32xf32>, vector<8x32xf32> -> vector<8x32xf32>
    %c1_12 = arith.constant 1 : index
    %c0_13 = arith.constant 0 : index
    %c0_14 = arith.constant 0 : index
    %14 = vector.load %arg4[%c1_12, %c0_13, %c0_14] : memref<3x1x32xf32, #tpu.memory_space<vmem>>, vector<1x1x32xf32>
    %15 = vector.shape_cast %14 : vector<1x1x32xf32> to vector<1x32xf32>
    %16 = vector.broadcast %15 : vector<1x32xf32> to vector<8x32xf32>
    %17 = arith.addf %13, %16 : vector<8x32xf32>
    %c2 = arith.constant 2 : index
    %c0_15 = arith.constant 0 : index
    %c0_16 = arith.constant 0 : index
    %18 = vector.load %arg3[%c2, %c0_15, %c0_16] : memref<3x32x32xf32, #tpu.memory_space<vmem>>, vector<1x32x32xf32>
    %19 = vector.shape_cast %18 : vector<1x32x32xf32> to vector<32x32xf32>
    %cst_17 = arith.constant dense<0.000000e+00> : vector<8x32xf32>
    %20 = tpu.matmul %1, %19, %cst_17 {dimension_numbers = #tpu.dot_dimension_numbers<[1], [0], [0], [1], [0, 0, 1, 1], [], []>} : vector<8x32xf32>, vector<32x32xf32>, vector<8x32xf32> -> vector<8x32xf32>
    %c2_18 = arith.constant 2 : index
    %c0_19 = arith.constant 0 : index
    %c0_20 = arith.constant 0 : index
    %21 = vector.load %arg4[%c2_18, %c0_19, %c0_20] : memref<3x1x32xf32, #tpu.memory_space<vmem>>, vector<1x1x32xf32>
    %22 = vector.shape_cast %21 : vector<1x1x32xf32> to vector<1x32xf32>
    %23 = vector.broadcast %22 : vector<1x32xf32> to vector<8x32xf32>
    %24 = arith.addf %20, %23 : vector<8x32xf32>
    %25 = vector.extract_strided_slice %10 {offsets = [0, 0], sizes = [8, 8], strides = [1, 1]} : vector<8x32xf32> to vector<8x8xf32>
    %26 = vector.extract_strided_slice %17 {offsets = [0, 0], sizes = [8, 8], strides = [1, 1]} : vector<8x32xf32> to vector<8x8xf32>
    %27 = tpu.transpose %26, [1, 0] : vector<8x8xf32> -> vector<8x8xf32>
    %cst_21 = arith.constant dense<0.000000e+00> : vector<8x8xf32>
    %28 = tpu.matmul %25, %27, %cst_21 {dimension_numbers = #tpu.dot_dimension_numbers<[1], [0], [0], [1], [0, 0, 1, 1], [], []>} : vector<8x8xf32>, vector<8x8xf32>, vector<8x8xf32> -> vector<8x8xf32>
    %cst_22 = arith.constant dense<0xFF800000> : vector<8xf32>
    %29 = vector.multi_reduction <maximumf>, %28, %cst_22 [1] : vector<8x8xf32> to vector<8xf32>
    %30 = vector.shape_cast %29 : vector<8xf32> to vector<8x1xf32>
    %31 = vector.broadcast %30 : vector<8x1xf32> to vector<8x8xf32>
    %32 = arith.subf %28, %31 : vector<8x8xf32>
    %33 = math.exp %32 : vector<8x8xf32>
    %cst_23 = arith.constant dense<0.000000e+00> : vector<8xf32>
    %34 = vector.multi_reduction <add>, %33, %cst_23 [1] : vector<8x8xf32> to vector<8xf32>
    %35 = vector.shape_cast %34 : vector<8xf32> to vector<8x1xf32>
    %36 = tpu.reciprocal %35 {approx = true} : vector<8x1xf32> -> vector<8x1xf32>
    %37 = vector.broadcast %36 : vector<8x1xf32> to vector<8x8xf32>
    %38 = arith.mulf %33, %37 : vector<8x8xf32>
    %39 = vector.extract_strided_slice %24 {offsets = [0, 0], sizes = [8, 8], strides = [1, 1]} : vector<8x32xf32> to vector<8x8xf32>
    %cst_24 = arith.constant dense<0.000000e+00> : vector<8x8xf32>
    %40 = tpu.matmul %38, %39, %cst_24 {dimension_numbers = #tpu.dot_dimension_numbers<[1], [0], [0], [1], [0, 0, 1, 1], [], []>} : vector<8x8xf32>, vector<8x8xf32>, vector<8x8xf32> -> vector<8x8xf32>
    %41 = vector.extract_strided_slice %10 {offsets = [0, 8], sizes = [8, 8], strides = [1, 1]} : vector<8x32xf32> to vector<8x8xf32>
    %42 = vector.extract_strided_slice %17 {offsets = [0, 8], sizes = [8, 8], strides = [1, 1]} : vector<8x32xf32> to vector<8x8xf32>
    %43 = tpu.transpose %42, [1, 0] : vector<8x8xf32> -> vector<8x8xf32>
    %cst_25 = arith.constant dense<0.000000e+00> : vector<8x8xf32>
    %44 = tpu.matmul %41, %43, %cst_25 {dimension_numbers = #tpu.dot_dimension_numbers<[1], [0], [0], [1], [0, 0, 1, 1], [], []>} : vector<8x8xf32>, vector<8x8xf32>, vector<8x8xf32> -> vector<8x8xf32>
    %cst_26 = arith.constant dense<0xFF800000> : vector<8xf32>
    %45 = vector.multi_reduction <maximumf>, %44, %cst_26 [1] : vector<8x8xf32> to vector<8xf32>
    %46 = vector.shape_cast %45 : vector<8xf32> to vector<8x1xf32>
    %47 = vector.broadcast %46 : vector<8x1xf32> to vector<8x8xf32>
    %48 = arith.subf %44, %47 : vector<8x8xf32>
    %49 = math.exp %48 : vector<8x8xf32>
    %cst_27 = arith.constant dense<0.000000e+00> : vector<8xf32>
    %50 = vector.multi_reduction <add>, %49, %cst_27 [1] : vector<8x8xf32> to vector<8xf32>
    %51 = vector.shape_cast %50 : vector<8xf32> to vector<8x1xf32>
    %52 = tpu.reciprocal %51 {approx = true} : vector<8x1xf32> -> vector<8x1xf32>
    %53 = vector.broadcast %52 : vector<8x1xf32> to vector<8x8xf32>
    %54 = arith.mulf %49, %53 : vector<8x8xf32>
    %55 = vector.extract_strided_slice %24 {offsets = [0, 8], sizes = [8, 8], strides = [1, 1]} : vector<8x32xf32> to vector<8x8xf32>
    %cst_28 = arith.constant dense<0.000000e+00> : vector<8x8xf32>
    %56 = tpu.matmul %54, %55, %cst_28 {dimension_numbers = #tpu.dot_dimension_numbers<[1], [0], [0], [1], [0, 0, 1, 1], [], []>} : vector<8x8xf32>, vector<8x8xf32>, vector<8x8xf32> -> vector<8x8xf32>
    %57 = vector.extract_strided_slice %10 {offsets = [0, 16], sizes = [8, 8], strides = [1, 1]} : vector<8x32xf32> to vector<8x8xf32>
    %58 = vector.extract_strided_slice %17 {offsets = [0, 16], sizes = [8, 8], strides = [1, 1]} : vector<8x32xf32> to vector<8x8xf32>
    %59 = tpu.transpose %58, [1, 0] : vector<8x8xf32> -> vector<8x8xf32>
    %cst_29 = arith.constant dense<0.000000e+00> : vector<8x8xf32>
    %60 = tpu.matmul %57, %59, %cst_29 {dimension_numbers = #tpu.dot_dimension_numbers<[1], [0], [0], [1], [0, 0, 1, 1], [], []>} : vector<8x8xf32>, vector<8x8xf32>, vector<8x8xf32> -> vector<8x8xf32>
    %cst_30 = arith.constant dense<0xFF800000> : vector<8xf32>
    %61 = vector.multi_reduction <maximumf>, %60, %cst_30 [1] : vector<8x8xf32> to vector<8xf32>
    %62 = vector.shape_cast %61 : vector<8xf32> to vector<8x1xf32>
    %63 = vector.broadcast %62 : vector<8x1xf32> to vector<8x8xf32>
    %64 = arith.subf %60, %63 : vector<8x8xf32>
    %65 = math.exp %64 : vector<8x8xf32>
    %cst_31 = arith.constant dense<0.000000e+00> : vector<8xf32>
    %66 = vector.multi_reduction <add>, %65, %cst_31 [1] : vector<8x8xf32> to vector<8xf32>
    %67 = vector.shape_cast %66 : vector<8xf32> to vector<8x1xf32>
    %68 = tpu.reciprocal %67 {approx = true} : vector<8x1xf32> -> vector<8x1xf32>
    %69 = vector.broadcast %68 : vector<8x1xf32> to vector<8x8xf32>
    %70 = arith.mulf %65, %69 : vector<8x8xf32>
    %71 = vector.extract_strided_slice %24 {offsets = [0, 16], sizes = [8, 8], strides = [1, 1]} : vector<8x32xf32> to vector<8x8xf32>
    %cst_32 = arith.constant dense<0.000000e+00> : vector<8x8xf32>
    %72 = tpu.matmul %70, %71, %cst_32 {dimension_numbers = #tpu.dot_dimension_numbers<[1], [0], [0], [1], [0, 0, 1, 1], [], []>} : vector<8x8xf32>, vector<8x8xf32>, vector<8x8xf32> -> vector<8x8xf32>
    %73 = vector.extract_strided_slice %10 {offsets = [0, 24], sizes = [8, 8], strides = [1, 1]} : vector<8x32xf32> to vector<8x8xf32>
    %74 = vector.extract_strided_slice %17 {offsets = [0, 24], sizes = [8, 8], strides = [1, 1]} : vector<8x32xf32> to vector<8x8xf32>
    %75 = tpu.transpose %74, [1, 0] : vector<8x8xf32> -> vector<8x8xf32>
    %cst_33 = arith.constant dense<0.000000e+00> : vector<8x8xf32>
    %76 = tpu.matmul %73, %75, %cst_33 {dimension_numbers = #tpu.dot_dimension_numbers<[1], [0], [0], [1], [0, 0, 1, 1], [], []>} : vector<8x8xf32>, vector<8x8xf32>, vector<8x8xf32> -> vector<8x8xf32>
    %cst_34 = arith.constant dense<0xFF800000> : vector<8xf32>
    %77 = vector.multi_reduction <maximumf>, %76, %cst_34 [1] : vector<8x8xf32> to vector<8xf32>
    %78 = vector.shape_cast %77 : vector<8xf32> to vector<8x1xf32>
    %79 = vector.broadcast %78 : vector<8x1xf32> to vector<8x8xf32>
    %80 = arith.subf %76, %79 : vector<8x8xf32>
    %81 = math.exp %80 : vector<8x8xf32>
    %cst_35 = arith.constant dense<0.000000e+00> : vector<8xf32>
    %82 = vector.multi_reduction <add>, %81, %cst_35 [1] : vector<8x8xf32> to vector<8xf32>
    %83 = vector.shape_cast %82 : vector<8xf32> to vector<8x1xf32>
    %84 = tpu.reciprocal %83 {approx = true} : vector<8x1xf32> -> vector<8x1xf32>
    %85 = vector.broadcast %84 : vector<8x1xf32> to vector<8x8xf32>
    %86 = arith.mulf %81, %85 : vector<8x8xf32>
    %87 = vector.extract_strided_slice %24 {offsets = [0, 24], sizes = [8, 8], strides = [1, 1]} : vector<8x32xf32> to vector<8x8xf32>
    %cst_36 = arith.constant dense<0.000000e+00> : vector<8x8xf32>
    %88 = tpu.matmul %86, %87, %cst_36 {dimension_numbers = #tpu.dot_dimension_numbers<[1], [0], [0], [1], [0, 0, 1, 1], [], []>} : vector<8x8xf32>, vector<8x8xf32>, vector<8x8xf32> -> vector<8x8xf32>
    %89 = tpu.concatenate %40, %56, %72, %88 in 1 : vector<8x8xf32>, vector<8x8xf32>, vector<8x8xf32>, vector<8x8xf32> -> vector<8x32xf32>
    %c0_37 = arith.constant 0 : index
    %c0_38 = arith.constant 0 : index
    %90 = vector.load %arg5[%c0_37, %c0_38] : memref<32x32xf32, #tpu.memory_space<vmem>>, vector<32x32xf32>
    %cst_39 = arith.constant dense<0.000000e+00> : vector<8x32xf32>
    %91 = tpu.matmul %89, %90, %cst_39 {dimension_numbers = #tpu.dot_dimension_numbers<[1], [0], [0], [1], [0, 0, 1, 1], [], []>} : vector<8x32xf32>, vector<32x32xf32>, vector<8x32xf32> -> vector<8x32xf32>
    %c0_40 = arith.constant 0 : index
    %c0_41 = arith.constant 0 : index
    %92 = vector.load %arg6[%c0_40, %c0_41] : memref<1x32xf32, #tpu.memory_space<vmem>>, vector<1x32xf32>
    %93 = vector.broadcast %92 : vector<1x32xf32> to vector<8x32xf32>
    %94 = arith.addf %91, %93 : vector<8x32xf32>
    %95 = arith.addf %1, %94 : vector<8x32xf32>
    %c0_42 = arith.constant 0 : index
    %c0_43 = arith.constant 0 : index
    %96 = vector.load %arg11[%c0_42, %c0_43] : memref<1x32xf32, #tpu.memory_space<vmem>>, vector<1x32xf32>
    %c0_44 = arith.constant 0 : index
    %c0_45 = arith.constant 0 : index
    %97 = vector.load %arg12[%c0_44, %c0_45] : memref<1x32xf32, #tpu.memory_space<vmem>>, vector<1x32xf32>
    %cst_46 = arith.constant dense<0.000000e+00> : vector<8xf32>
    %98 = vector.multi_reduction <add>, %95, %cst_46 [1] : vector<8x32xf32> to vector<8xf32>
    %99 = vector.shape_cast %98 : vector<8xf32> to vector<8x1xf32>
    %cst_47 = arith.constant 3.200000e+01 : f32
    %100 = vector.broadcast %cst_47 : f32 to vector<8x1xf32>
    %101 = arith.divf %99, %100 : vector<8x1xf32>
    %102 = vector.broadcast %101 : vector<8x1xf32> to vector<8x32xf32>
    %103 = arith.subf %95, %102 : vector<8x32xf32>
    %104 = arith.mulf %103, %103 : vector<8x32xf32>
    %cst_48 = arith.constant dense<0.000000e+00> : vector<8xf32>
    %105 = vector.multi_reduction <add>, %104, %cst_48 [1] : vector<8x32xf32> to vector<8xf32>
    %106 = vector.shape_cast %105 : vector<8xf32> to vector<8x1xf32>
    %cst_49 = arith.constant 3.200000e+01 : f32
    %107 = vector.broadcast %cst_49 : f32 to vector<8x1xf32>
    %108 = arith.divf %106, %107 : vector<8x1xf32>
    %109 = vector.broadcast %101 : vector<8x1xf32> to vector<8x32xf32>
    %110 = arith.subf %95, %109 : vector<8x32xf32>
    %cst_50 = arith.constant 9.99999974E-6 : f32
    %111 = vector.broadcast %cst_50 : f32 to vector<8x1xf32>
    %112 = arith.addf %108, %111 : vector<8x1xf32>
    %113 = math.rsqrt %112 : vector<8x1xf32>
    %114 = vector.broadcast %113 : vector<8x1xf32> to vector<8x32xf32>
    %115 = arith.mulf %110, %114 : vector<8x32xf32>
    %116 = vector.broadcast %96 : vector<1x32xf32> to vector<8x32xf32>
    %117 = arith.mulf %115, %116 : vector<8x32xf32>
    %118 = vector.broadcast %97 : vector<1x32xf32> to vector<8x32xf32>
    %119 = arith.addf %117, %118 : vector<8x32xf32>
    %120 = vector.shape_cast %119 : vector<8x32xf32> to vector<1x8x32xf32>
    %121 = vector.extract_strided_slice %120 {offsets = [0, 7, 0], sizes = [1, 1, 32], strides = [1, 1, 1]} : vector<1x8x32xf32> to vector<1x1x32xf32>
    %122 = vector.shape_cast %121 : vector<1x1x32xf32> to vector<1x32xf32>
    %c0_51 = arith.constant 0 : index
    %c0_52 = arith.constant 0 : index
    %c0_53 = arith.constant 0 : index
    %123 = vector.load %arg2[%c0_51, %c0_52, %c0_53] : memref<1x8x32xf32, #tpu.memory_space<vmem>>, vector<1x8x32xf32>
    %124 = vector.shape_cast %123 : vector<1x8x32xf32> to vector<8x32xf32>
    %c0_54 = arith.constant 0 : index
    %c0_55 = arith.constant 0 : index
    %c0_56 = arith.constant 0 : index
    %125 = vector.load %arg7[%c0_54, %c0_55, %c0_56] : memref<3x32x32xf32, #tpu.memory_space<vmem>>, vector<1x32x32xf32>
    %126 = vector.shape_cast %125 : vector<1x32x32xf32> to vector<32x32xf32>
    %cst_57 = arith.constant dense<0.000000e+00> : vector<1x32xf32>
    %127 = tpu.matmul %122, %126, %cst_57 {dimension_numbers = #tpu.dot_dimension_numbers<[1], [0], [0], [1], [0, 0, 1, 1], [], []>} : vector<1x32xf32>, vector<32x32xf32>, vector<1x32xf32> -> vector<1x32xf32>
    %c0_58 = arith.constant 0 : index
    %c0_59 = arith.constant 0 : index
    %c0_60 = arith.constant 0 : index
    %128 = vector.load %arg8[%c0_58, %c0_59, %c0_60] : memref<3x1x32xf32, #tpu.memory_space<vmem>>, vector<1x1x32xf32>
    %129 = vector.shape_cast %128 : vector<1x1x32xf32> to vector<1x32xf32>
    %130 = arith.addf %127, %129 : vector<1x32xf32>
    %cst_61 = arith.constant 0.353553385 : f32
    %131 = vector.broadcast %cst_61 : f32 to vector<1x32xf32>
    %132 = arith.mulf %130, %131 : vector<1x32xf32>
    %c1_62 = arith.constant 1 : index
    %c0_63 = arith.constant 0 : index
    %c0_64 = arith.constant 0 : index
    %133 = vector.load %arg7[%c1_62, %c0_63, %c0_64] : memref<3x32x32xf32, #tpu.memory_space<vmem>>, vector<1x32x32xf32>
    %134 = vector.shape_cast %133 : vector<1x32x32xf32> to vector<32x32xf32>
    %cst_65 = arith.constant dense<0.000000e+00> : vector<8x32xf32>
    %135 = tpu.matmul %124, %134, %cst_65 {dimension_numbers = #tpu.dot_dimension_numbers<[1], [0], [0], [1], [0, 0, 1, 1], [], []>} : vector<8x32xf32>, vector<32x32xf32>, vector<8x32xf32> -> vector<8x32xf32>
    %c1_66 = arith.constant 1 : index
    %c0_67 = arith.constant 0 : index
    %c0_68 = arith.constant 0 : index
    %136 = vector.load %arg8[%c1_66, %c0_67, %c0_68] : memref<3x1x32xf32, #tpu.memory_space<vmem>>, vector<1x1x32xf32>
    %137 = vector.shape_cast %136 : vector<1x1x32xf32> to vector<1x32xf32>
    %138 = vector.broadcast %137 : vector<1x32xf32> to vector<8x32xf32>
    %139 = arith.addf %135, %138 : vector<8x32xf32>
    %c2_69 = arith.constant 2 : index
    %c0_70 = arith.constant 0 : index
    %c0_71 = arith.constant 0 : index
    %140 = vector.load %arg7[%c2_69, %c0_70, %c0_71] : memref<3x32x32xf32, #tpu.memory_space<vmem>>, vector<1x32x32xf32>
    %141 = vector.shape_cast %140 : vector<1x32x32xf32> to vector<32x32xf32>
    %cst_72 = arith.constant dense<0.000000e+00> : vector<8x32xf32>
    %142 = tpu.matmul %124, %141, %cst_72 {dimension_numbers = #tpu.dot_dimension_numbers<[1], [0], [0], [1], [0, 0, 1, 1], [], []>} : vector<8x32xf32>, vector<32x32xf32>, vector<8x32xf32> -> vector<8x32xf32>
    %c2_73 = arith.constant 2 : index
    %c0_74 = arith.constant 0 : index
    %c0_75 = arith.constant 0 : index
    %143 = vector.load %arg8[%c2_73, %c0_74, %c0_75] : memref<3x1x32xf32, #tpu.memory_space<vmem>>, vector<1x1x32xf32>
    %144 = vector.shape_cast %143 : vector<1x1x32xf32> to vector<1x32xf32>
    %145 = vector.broadcast %144 : vector<1x32xf32> to vector<8x32xf32>
    %146 = arith.addf %142, %145 : vector<8x32xf32>
    %147 = vector.extract_strided_slice %132 {offsets = [0, 0], sizes = [1, 8], strides = [1, 1]} : vector<1x32xf32> to vector<1x8xf32>
    %148 = vector.extract_strided_slice %139 {offsets = [0, 0], sizes = [8, 8], strides = [1, 1]} : vector<8x32xf32> to vector<8x8xf32>
    %149 = tpu.transpose %148, [1, 0] : vector<8x8xf32> -> vector<8x8xf32>
    %cst_76 = arith.constant dense<0.000000e+00> : vector<1x8xf32>
    %150 = tpu.matmul %147, %149, %cst_76 {dimension_numbers = #tpu.dot_dimension_numbers<[1], [0], [0], [1], [0, 0, 1, 1], [], []>} : vector<1x8xf32>, vector<8x8xf32>, vector<1x8xf32> -> vector<1x8xf32>
    %cst_77 = arith.constant dense<0xFF800000> : vector<1xf32>
    %151 = vector.multi_reduction <maximumf>, %150, %cst_77 [1] : vector<1x8xf32> to vector<1xf32>
    %152 = vector.shape_cast %151 : vector<1xf32> to vector<1x1xf32>
    %153 = vector.broadcast %152 : vector<1x1xf32> to vector<1x8xf32>
    %154 = arith.subf %150, %153 : vector<1x8xf32>
    %155 = math.exp %154 : vector<1x8xf32>
    %cst_78 = arith.constant dense<0.000000e+00> : vector<1xf32>
    %156 = vector.multi_reduction <add>, %155, %cst_78 [1] : vector<1x8xf32> to vector<1xf32>
    %157 = vector.shape_cast %156 : vector<1xf32> to vector<1x1xf32>
    %158 = tpu.reciprocal %157 {approx = true} : vector<1x1xf32> -> vector<1x1xf32>
    %159 = vector.broadcast %158 : vector<1x1xf32> to vector<1x8xf32>
    %160 = arith.mulf %155, %159 : vector<1x8xf32>
    %161 = vector.extract_strided_slice %146 {offsets = [0, 0], sizes = [8, 8], strides = [1, 1]} : vector<8x32xf32> to vector<8x8xf32>
    %cst_79 = arith.constant dense<0.000000e+00> : vector<1x8xf32>
    %162 = tpu.matmul %160, %161, %cst_79 {dimension_numbers = #tpu.dot_dimension_numbers<[1], [0], [0], [1], [0, 0, 1, 1], [], []>} : vector<1x8xf32>, vector<8x8xf32>, vector<1x8xf32> -> vector<1x8xf32>
    %163 = vector.extract_strided_slice %132 {offsets = [0, 8], sizes = [1, 8], strides = [1, 1]} : vector<1x32xf32> to vector<1x8xf32>
    %164 = vector.extract_strided_slice %139 {offsets = [0, 8], sizes = [8, 8], strides = [1, 1]} : vector<8x32xf32> to vector<8x8xf32>
    %165 = tpu.transpose %164, [1, 0] : vector<8x8xf32> -> vector<8x8xf32>
    %cst_80 = arith.constant dense<0.000000e+00> : vector<1x8xf32>
    %166 = tpu.matmul %163, %165, %cst_80 {dimension_numbers = #tpu.dot_dimension_numbers<[1], [0], [0], [1], [0, 0, 1, 1], [], []>} : vector<1x8xf32>, vector<8x8xf32>, vector<1x8xf32> -> vector<1x8xf32>
    %cst_81 = arith.constant dense<0xFF800000> : vector<1xf32>
    %167 = vector.multi_reduction <maximumf>, %166, %cst_81 [1] : vector<1x8xf32> to vector<1xf32>
    %168 = vector.shape_cast %167 : vector<1xf32> to vector<1x1xf32>
    %169 = vector.broadcast %168 : vector<1x1xf32> to vector<1x8xf32>
    %170 = arith.subf %166, %169 : vector<1x8xf32>
    %171 = math.exp %170 : vector<1x8xf32>
    %cst_82 = arith.constant dense<0.000000e+00> : vector<1xf32>
    %172 = vector.multi_reduction <add>, %171, %cst_82 [1] : vector<1x8xf32> to vector<1xf32>
    %173 = vector.shape_cast %172 : vector<1xf32> to vector<1x1xf32>
    %174 = tpu.reciprocal %173 {approx = true} : vector<1x1xf32> -> vector<1x1xf32>
    %175 = vector.broadcast %174 : vector<1x1xf32> to vector<1x8xf32>
    %176 = arith.mulf %171, %175 : vector<1x8xf32>
    %177 = vector.extract_strided_slice %146 {offsets = [0, 8], sizes = [8, 8], strides = [1, 1]} : vector<8x32xf32> to vector<8x8xf32>
    %cst_83 = arith.constant dense<0.000000e+00> : vector<1x8xf32>
    %178 = tpu.matmul %176, %177, %cst_83 {dimension_numbers = #tpu.dot_dimension_numbers<[1], [0], [0], [1], [0, 0, 1, 1], [], []>} : vector<1x8xf32>, vector<8x8xf32>, vector<1x8xf32> -> vector<1x8xf32>
    %179 = vector.extract_strided_slice %132 {offsets = [0, 16], sizes = [1, 8], strides = [1, 1]} : vector<1x32xf32> to vector<1x8xf32>
    %180 = vector.extract_strided_slice %139 {offsets = [0, 16], sizes = [8, 8], strides = [1, 1]} : vector<8x32xf32> to vector<8x8xf32>
    %181 = tpu.transpose %180, [1, 0] : vector<8x8xf32> -> vector<8x8xf32>
    %cst_84 = arith.constant dense<0.000000e+00> : vector<1x8xf32>
    %182 = tpu.matmul %179, %181, %cst_84 {dimension_numbers = #tpu.dot_dimension_numbers<[1], [0], [0], [1], [0, 0, 1, 1], [], []>} : vector<1x8xf32>, vector<8x8xf32>, vector<1x8xf32> -> vector<1x8xf32>
    %cst_85 = arith.constant dense<0xFF800000> : vector<1xf32>
    %183 = vector.multi_reduction <maximumf>, %182, %cst_85 [1] : vector<1x8xf32> to vector<1xf32>
    %184 = vector.shape_cast %183 : vector<1xf32> to vector<1x1xf32>
    %185 = vector.broadcast %184 : vector<1x1xf32> to vector<1x8xf32>
    %186 = arith.subf %182, %185 : vector<1x8xf32>
    %187 = math.exp %186 : vector<1x8xf32>
    %cst_86 = arith.constant dense<0.000000e+00> : vector<1xf32>
    %188 = vector.multi_reduction <add>, %187, %cst_86 [1] : vector<1x8xf32> to vector<1xf32>
    %189 = vector.shape_cast %188 : vector<1xf32> to vector<1x1xf32>
    %190 = tpu.reciprocal %189 {approx = true} : vector<1x1xf32> -> vector<1x1xf32>
    %191 = vector.broadcast %190 : vector<1x1xf32> to vector<1x8xf32>
    %192 = arith.mulf %187, %191 : vector<1x8xf32>
    %193 = vector.extract_strided_slice %146 {offsets = [0, 16], sizes = [8, 8], strides = [1, 1]} : vector<8x32xf32> to vector<8x8xf32>
    %cst_87 = arith.constant dense<0.000000e+00> : vector<1x8xf32>
    %194 = tpu.matmul %192, %193, %cst_87 {dimension_numbers = #tpu.dot_dimension_numbers<[1], [0], [0], [1], [0, 0, 1, 1], [], []>} : vector<1x8xf32>, vector<8x8xf32>, vector<1x8xf32> -> vector<1x8xf32>
    %195 = vector.extract_strided_slice %132 {offsets = [0, 24], sizes = [1, 8], strides = [1, 1]} : vector<1x32xf32> to vector<1x8xf32>
    %196 = vector.extract_strided_slice %139 {offsets = [0, 24], sizes = [8, 8], strides = [1, 1]} : vector<8x32xf32> to vector<8x8xf32>
    %197 = tpu.transpose %196, [1, 0] : vector<8x8xf32> -> vector<8x8xf32>
    %cst_88 = arith.constant dense<0.000000e+00> : vector<1x8xf32>
    %198 = tpu.matmul %195, %197, %cst_88 {dimension_numbers = #tpu.dot_dimension_numbers<[1], [0], [0], [1], [0, 0, 1, 1], [], []>} : vector<1x8xf32>, vector<8x8xf32>, vector<1x8xf32> -> vector<1x8xf32>
    %cst_89 = arith.constant dense<0xFF800000> : vector<1xf32>
    %199 = vector.multi_reduction <maximumf>, %198, %cst_89 [1] : vector<1x8xf32> to vector<1xf32>
    %200 = vector.shape_cast %199 : vector<1xf32> to vector<1x1xf32>
    %201 = vector.broadcast %200 : vector<1x1xf32> to vector<1x8xf32>
    %202 = arith.subf %198, %201 : vector<1x8xf32>
    %203 = math.exp %202 : vector<1x8xf32>
    %cst_90 = arith.constant dense<0.000000e+00> : vector<1xf32>
    %204 = vector.multi_reduction <add>, %203, %cst_90 [1] : vector<1x8xf32> to vector<1xf32>
    %205 = vector.shape_cast %204 : vector<1xf32> to vector<1x1xf32>
    %206 = tpu.reciprocal %205 {approx = true} : vector<1x1xf32> -> vector<1x1xf32>
    %207 = vector.broadcast %206 : vector<1x1xf32> to vector<1x8xf32>
    %208 = arith.mulf %203, %207 : vector<1x8xf32>
    %209 = vector.extract_strided_slice %146 {offsets = [0, 24], sizes = [8, 8], strides = [1, 1]} : vector<8x32xf32> to vector<8x8xf32>
    %cst_91 = arith.constant dense<0.000000e+00> : vector<1x8xf32>
    %210 = tpu.matmul %208, %209, %cst_91 {dimension_numbers = #tpu.dot_dimension_numbers<[1], [0], [0], [1], [0, 0, 1, 1], [], []>} : vector<1x8xf32>, vector<8x8xf32>, vector<1x8xf32> -> vector<1x8xf32>
    %211 = tpu.concatenate %162, %178, %194, %210 in 1 : vector<1x8xf32>, vector<1x8xf32>, vector<1x8xf32>, vector<1x8xf32> -> vector<1x32xf32>
    %c0_92 = arith.constant 0 : index
    %c0_93 = arith.constant 0 : index
    %212 = vector.load %arg9[%c0_92, %c0_93] : memref<32x32xf32, #tpu.memory_space<vmem>>, vector<32x32xf32>
    %cst_94 = arith.constant dense<0.000000e+00> : vector<1x32xf32>
    %213 = tpu.matmul %211, %212, %cst_94 {dimension_numbers = #tpu.dot_dimension_numbers<[1], [0], [0], [1], [0, 0, 1, 1], [], []>} : vector<1x32xf32>, vector<32x32xf32>, vector<1x32xf32> -> vector<1x32xf32>
    %c0_95 = arith.constant 0 : index
    %c0_96 = arith.constant 0 : index
    %214 = vector.load %arg10[%c0_95, %c0_96] : memref<1x32xf32, #tpu.memory_space<vmem>>, vector<1x32xf32>
    %215 = arith.addf %213, %214 : vector<1x32xf32>
    %216 = arith.addf %122, %215 : vector<1x32xf32>
    %c0_97 = arith.constant 0 : index
    %c0_98 = arith.constant 0 : index
    %217 = vector.load %arg11[%c0_97, %c0_98] : memref<1x32xf32, #tpu.memory_space<vmem>>, vector<1x32xf32>
    %c0_99 = arith.constant 0 : index
    %c0_100 = arith.constant 0 : index
    %218 = vector.load %arg12[%c0_99, %c0_100] : memref<1x32xf32, #tpu.memory_space<vmem>>, vector<1x32xf32>
    %cst_101 = arith.constant dense<0.000000e+00> : vector<1xf32>
    %219 = vector.multi_reduction <add>, %216, %cst_101 [1] : vector<1x32xf32> to vector<1xf32>
    %220 = vector.shape_cast %219 : vector<1xf32> to vector<1x1xf32>
    %cst_102 = arith.constant 3.200000e+01 : f32
    %221 = vector.broadcast %cst_102 : f32 to vector<1x1xf32>
    %222 = arith.divf %220, %221 : vector<1x1xf32>
    %223 = vector.broadcast %222 : vector<1x1xf32> to vector<1x32xf32>
    %224 = arith.subf %216, %223 : vector<1x32xf32>
    %225 = arith.mulf %224, %224 : vector<1x32xf32>
    %cst_103 = arith.constant dense<0.000000e+00> : vector<1xf32>
    %226 = vector.multi_reduction <add>, %225, %cst_103 [1] : vector<1x32xf32> to vector<1xf32>
    %227 = vector.shape_cast %226 : vector<1xf32> to vector<1x1xf32>
    %cst_104 = arith.constant 3.200000e+01 : f32
    %228 = vector.broadcast %cst_104 : f32 to vector<1x1xf32>
    %229 = arith.divf %227, %228 : vector<1x1xf32>
    %230 = vector.broadcast %222 : vector<1x1xf32> to vector<1x32xf32>
    %231 = arith.subf %216, %230 : vector<1x32xf32>
    %cst_105 = arith.constant 9.99999974E-6 : f32
    %232 = vector.broadcast %cst_105 : f32 to vector<1x1xf32>
    %233 = arith.addf %229, %232 : vector<1x1xf32>
    %234 = math.rsqrt %233 : vector<1x1xf32>
    %235 = vector.broadcast %234 : vector<1x1xf32> to vector<1x32xf32>
    %236 = arith.mulf %231, %235 : vector<1x32xf32>
    %237 = arith.mulf %236, %217 : vector<1x32xf32>
    %238 = arith.addf %237, %218 : vector<1x32xf32>
    %239 = tpu.iota {dimensions = array<i32: 1>} : vector<1x8x32xi32>
    %240 = vector.shape_cast %238 : vector<1x32xf32> to vector<1x1x32xf32>
    %241 = vector.shape_cast %240 : vector<1x1x32xf32> to vector<1x1x32xf32>
    %242 = vector.broadcast %241 : vector<1x1x32xf32> to vector<1x8x32xf32>
    %c7_i32 = arith.constant 7 : i32
    %243 = vector.broadcast %c7_i32 : i32 to vector<1x8x32xi32>
    %244 = arith.cmpi eq, %239, %243 : vector<1x8x32xi32>
    %245 = arith.select %244, %242, %120 : vector<1x8x32xi1>, vector<1x8x32xf32>
    %246 = vector.shape_cast %245 : vector<1x8x32xf32> to vector<8x32xf32>
    %c0_106 = arith.constant 0 : index
    %c0_107 = arith.constant 0 : index
    %247 = vector.load %arg13[%c0_106, %c0_107] : memref<1x32xf32, #tpu.memory_space<vmem>>, vector<1x32xf32>
    %c0_108 = arith.constant 0 : index
    %c0_109 = arith.constant 0 : index
    %248 = vector.load %arg14[%c0_108, %c0_109] : memref<1x32xf32, #tpu.memory_space<vmem>>, vector<1x32xf32>
    %cst_110 = arith.constant dense<0.000000e+00> : vector<8xf32>
    %249 = vector.multi_reduction <add>, %246, %cst_110 [1] : vector<8x32xf32> to vector<8xf32>
    %250 = vector.shape_cast %249 : vector<8xf32> to vector<8x1xf32>
    %cst_111 = arith.constant 3.200000e+01 : f32
    %251 = vector.broadcast %cst_111 : f32 to vector<8x1xf32>
    %252 = arith.divf %250, %251 : vector<8x1xf32>
    %253 = vector.broadcast %252 : vector<8x1xf32> to vector<8x32xf32>
    %254 = arith.subf %246, %253 : vector<8x32xf32>
    %255 = arith.mulf %254, %254 : vector<8x32xf32>
    %cst_112 = arith.constant dense<0.000000e+00> : vector<8xf32>
    %256 = vector.multi_reduction <add>, %255, %cst_112 [1] : vector<8x32xf32> to vector<8xf32>
    %257 = vector.shape_cast %256 : vector<8xf32> to vector<8x1xf32>
    %cst_113 = arith.constant 3.200000e+01 : f32
    %258 = vector.broadcast %cst_113 : f32 to vector<8x1xf32>
    %259 = arith.divf %257, %258 : vector<8x1xf32>
    %260 = vector.broadcast %252 : vector<8x1xf32> to vector<8x32xf32>
    %261 = arith.subf %246, %260 : vector<8x32xf32>
    %cst_114 = arith.constant 9.99999974E-6 : f32
    %262 = vector.broadcast %cst_114 : f32 to vector<8x1xf32>
    %263 = arith.addf %259, %262 : vector<8x1xf32>
    %264 = math.rsqrt %263 : vector<8x1xf32>
    %265 = vector.broadcast %264 : vector<8x1xf32> to vector<8x32xf32>
    %266 = arith.mulf %261, %265 : vector<8x32xf32>
    %267 = vector.broadcast %247 : vector<1x32xf32> to vector<8x32xf32>
    %268 = arith.mulf %266, %267 : vector<8x32xf32>
    %269 = vector.broadcast %248 : vector<1x32xf32> to vector<8x32xf32>
    %270 = arith.addf %268, %269 : vector<8x32xf32>
    %c0_115 = arith.constant 0 : index
    %c0_116 = arith.constant 0 : index
    %271 = vector.load %arg15[%c0_115, %c0_116] : memref<32x32xf32, #tpu.memory_space<vmem>>, vector<32x32xf32>
    %cst_117 = arith.constant dense<0.000000e+00> : vector<8x32xf32>
    %272 = tpu.matmul %270, %271, %cst_117 {dimension_numbers = #tpu.dot_dimension_numbers<[1], [0], [0], [1], [0, 0, 1, 1], [], []>} : vector<8x32xf32>, vector<32x32xf32>, vector<8x32xf32> -> vector<8x32xf32>
    %c0_118 = arith.constant 0 : index
    %c0_119 = arith.constant 0 : index
    %273 = vector.load %arg16[%c0_118, %c0_119] : memref<1x32xf32, #tpu.memory_space<vmem>>, vector<1x32xf32>
    %274 = vector.broadcast %273 : vector<1x32xf32> to vector<8x32xf32>
    %275 = arith.addf %272, %274 : vector<8x32xf32>
    %cst_120 = arith.constant 0.000000e+00 : f32
    %276 = vector.broadcast %cst_120 : f32 to vector<8x32xf32>
    %277 = arith.maximumf %275, %276 : vector<8x32xf32>
    %c0_121 = arith.constant 0 : index
    %c0_122 = arith.constant 0 : index
    %278 = vector.load %arg17[%c0_121, %c0_122] : memref<32x32xf32, #tpu.memory_space<vmem>>, vector<32x32xf32>
    %cst_123 = arith.constant dense<0.000000e+00> : vector<8x32xf32>
    %279 = tpu.matmul %277, %278, %cst_123 {dimension_numbers = #tpu.dot_dimension_numbers<[1], [0], [0], [1], [0, 0, 1, 1], [], []>} : vector<8x32xf32>, vector<32x32xf32>, vector<8x32xf32> -> vector<8x32xf32>
    %c0_124 = arith.constant 0 : index
    %c0_125 = arith.constant 0 : index
    %280 = vector.load %arg18[%c0_124, %c0_125] : memref<1x32xf32, #tpu.memory_space<vmem>>, vector<1x32xf32>
    %281 = vector.broadcast %280 : vector<1x32xf32> to vector<8x32xf32>
    %282 = arith.addf %279, %281 : vector<8x32xf32>
    %283 = vector.shape_cast %282 : vector<8x32xf32> to vector<1x8x32xf32>
    %c0_126 = arith.constant 0 : index
    %c0_127 = arith.constant 0 : index
    %c0_128 = arith.constant 0 : index
    %284 = vector.load %arg19[%c0_126, %c0_127, %c0_128] : memref<1x8x32xf32, #tpu.memory_space<vmem>>, vector<1x8x32xf32>
    tpu.vector_store %arg19[%c0_126, %c0_127, %c0_128], %283 {strides = array<i32>} : memref<1x8x32xf32, #tpu.memory_space<vmem>>, vector<1x8x32xf32>,
    return
  }
  func.func @transform_0(%arg0: i32) -> (i32, i32, i32) {
    %c0_i32 = arith.constant 0 : i32
    %c0_i32_0 = arith.constant 0 : i32
    %c0_i32_1 = arith.constant 0 : i32
    return %arg0, %c0_i32, %c0_i32_0 : i32, i32, i32
  }
  func.func @transform_1(%arg0: i32) -> (i32, i32, i32) {
    %c0_i32 = arith.constant 0 : i32
    %c0_i32_0 = arith.constant 0 : i32
    %c0_i32_1 = arith.constant 0 : i32
    return %arg0, %c0_i32, %c0_i32_0 : i32, i32, i32
  }
  func.func @transform_2(%arg0: i32) -> (i32, i32, i32) {
    %c0_i32 = arith.constant 0 : i32
    %c0_i32_0 = arith.constant 0 : i32
    %c0_i32_1 = arith.constant 0 : i32
    %c0_i32_2 = arith.constant 0 : i32
    return %c0_i32, %c0_i32_0, %c0_i32_1 : i32, i32, i32
  }
  func.func @transform_3(%arg0: i32) -> (i32, i32, i32) {
    %c0_i32 = arith.constant 0 : i32
    %c0_i32_0 = arith.constant 0 : i32
    %c0_i32_1 = arith.constant 0 : i32
    %c0_i32_2 = arith.constant 0 : i32
    return %c0_i32, %c0_i32_0, %c0_i32_1 : i32, i32, i32
  }
  func.func @transform_4(%arg0: i32) -> (i32, i32) {
    %c0_i32 = arith.constant 0 : i32
    %c0_i32_0 = arith.constant 0 : i32
    %c0_i32_1 = arith.constant 0 : i32
    return %c0_i32, %c0_i32_0 : i32, i32
  }
  func.func @transform_5(%arg0: i32) -> (i32, i32) {
    %c0_i32 = arith.constant 0 : i32
    %c0_i32_0 = arith.constant 0 : i32
    %c0_i32_1 = arith.constant 0 : i32
    return %c0_i32, %c0_i32_0 : i32, i32
  }
  func.func @transform_6(%arg0: i32) -> (i32, i32, i32) {
    %c0_i32 = arith.constant 0 : i32
    %c0_i32_0 = arith.constant 0 : i32
    %c0_i32_1 = arith.constant 0 : i32
    %c0_i32_2 = arith.constant 0 : i32
    return %c0_i32, %c0_i32_0, %c0_i32_1 : i32, i32, i32
  }
  func.func @transform_7(%arg0: i32) -> (i32, i32, i32) {
    %c0_i32 = arith.constant 0 : i32
    %c0_i32_0 = arith.constant 0 : i32
    %c0_i32_1 = arith.constant 0 : i32
    %c0_i32_2 = arith.constant 0 : i32
    return %c0_i32, %c0_i32_0, %c0_i32_1 : i32, i32, i32
  }
  func.func @transform_8(%arg0: i32) -> (i32, i32) {
    %c0_i32 = arith.constant 0 : i32
    %c0_i32_0 = arith.constant 0 : i32
    %c0_i32_1 = arith.constant 0 : i32
    return %c0_i32, %c0_i32_0 : i32, i32
  }
  func.func @transform_9(%arg0: i32) -> (i32, i32) {
    %c0_i32 = arith.constant 0 : i32
    %c0_i32_0 = arith.constant 0 : i32
    %c0_i32_1 = arith.constant 0 : i32
    return %c0_i32, %c0_i32_0 : i32, i32
  }
  func.func @transform_10(%arg0: i32) -> (i32, i32) {
    %c0_i32 = arith.constant 0 : i32
    %c0_i32_0 = arith.constant 0 : i32
    %c0_i32_1 = arith.constant 0 : i32
    return %c0_i32, %c0_i32_0 : i32, i32
  }
  func.func @transform_11(%arg0: i32) -> (i32, i32) {
    %c0_i32 = arith.constant 0 : i32
    %c0_i32_0 = arith.constant 0 : i32
    %c0_i32_1 = arith.constant 0 : i32
    return %c0_i32, %c0_i32_0 : i32, i32
  }
  func.func @transform_12(%arg0: i32) -> (i32, i32) {
    %c0_i32 = arith.constant 0 : i32
    %c0_i32_0 = arith.constant 0 : i32
    %c0_i32_1 = arith.constant 0 : i32
    return %c0_i32, %c0_i32_0 : i32, i32
  }
  func.func @transform_13(%arg0: i32) -> (i32, i32) {
    %c0_i32 = arith.constant 0 : i32
    %c0_i32_0 = arith.constant 0 : i32
    %c0_i32_1 = arith.constant 0 : i32
    return %c0_i32, %c0_i32_0 : i32, i32
  }
  func.func @transform_14(%arg0: i32) -> (i32, i32) {
    %c0_i32 = arith.constant 0 : i32
    %c0_i32_0 = arith.constant 0 : i32
    %c0_i32_1 = arith.constant 0 : i32
    return %c0_i32, %c0_i32_0 : i32, i32
  }
  func.func @transform_15(%arg0: i32) -> (i32, i32) {
    %c0_i32 = arith.constant 0 : i32
    %c0_i32_0 = arith.constant 0 : i32
    %c0_i32_1 = arith.constant 0 : i32
    return %c0_i32, %c0_i32_0 : i32, i32
  }
  func.func @transform_16(%arg0: i32) -> (i32, i32) {
    %c0_i32 = arith.constant 0 : i32
    %c0_i32_0 = arith.constant 0 : i32
    %c0_i32_1 = arith.constant 0 : i32
    return %c0_i32, %c0_i32_0 : i32, i32
  }
  func.func @transform_17(%arg0: i32) -> (i32, i32) {
    %c0_i32 = arith.constant 0 : i32
    %c0_i32_0 = arith.constant 0 : i32
    %c0_i32_1 = arith.constant 0 : i32
    return %c0_i32, %c0_i32_0 : i32, i32
  }
  func.func @transform_18(%arg0: i32) -> (i32, i32, i32) {
    %c0_i32 = arith.constant 0 : i32
    %c0_i32_0 = arith.constant 0 : i32
    %c0_i32_1 = arith.constant 0 : i32
    return %arg0, %c0_i32, %c0_i32_0 : i32, i32, i32
  }
}

</mosaic_0001>

<llo_original>
// kernel: tpu_custom_call.1
$region0: #{tpu_custom_call.1}
  #allocation0 [shape = 'u32[]', space=smem, size = 0x4, offset = 0x4, fixed_abs, tag = 'smem constant byte address 0x4 - core index']
  #allocation1 [shape = 'u32[72,128]{1,0:T(1,128)}', space=vmem, size = 0x9000, scoped, tag = 'internal scratch']
  %s0 = inlined_call_operand.hbm [shape: f32[2,8,32], index: 0, kind: input, shape index: {}]
  %s1 = inlined_call_operand.hbm [shape: f32[2,8,32], index: 1, kind: input, shape index: {}]
  %s2 = inlined_call_operand.hbm [shape: f32[3,32,32], index: 2, kind: input, shape index: {}]
  %s3 = inlined_call_operand.hbm [shape: f32[3,1,32], index: 3, kind: input, shape index: {}]
  %s4 = inlined_call_operand.hbm [shape: f32[32,32], index: 4, kind: input, shape index: {}]
  %s5 = inlined_call_operand.vmem [shape: f32[1,32], index: 5, kind: input, shape index: {}]
  %s6 = inlined_call_operand.hbm [shape: f32[3,32,32], index: 6, kind: input, shape index: {}]
  %s7 = inlined_call_operand.vmem [shape: f32[3,1,32], index: 7, kind: input, shape index: {}]
  %s8 = inlined_call_operand.hbm [shape: f32[32,32], index: 8, kind: input, shape index: {}]
  %s9 = inlined_call_operand.vmem [shape: f32[1,32], index: 9, kind: input, shape index: {}]
  %s10 = inlined_call_operand.vmem [shape: f32[1,32], index: 10, kind: input, shape index: {}]
  %s11 = inlined_call_operand.vmem [shape: f32[1,32], index: 11, kind: input, shape index: {}]
  %s12 = inlined_call_operand.vmem [shape: f32[1,32], index: 12, kind: input, shape index: {}]
  %s13 = inlined_call_operand.vmem [shape: f32[1,32], index: 13, kind: input, shape index: {}]
  %s14 = inlined_call_operand.hbm [shape: f32[32,32], index: 14, kind: input, shape index: {}]
  %s15 = inlined_call_operand.vmem [shape: f32[1,32], index: 15, kind: input, shape index: {}]
  %s16 = inlined_call_operand.hbm [shape: f32[32,32], index: 16, kind: input, shape index: {}]
  %s17 = inlined_call_operand.vmem [shape: f32[1,32], index: 17, kind: input, shape index: {}]
  %s18 = inlined_call_operand.hbm [shape: f32[2,8,32], index: 18, kind: output, shape index: {}]
  %s19 = sld [smem:[#allocation0]]
  $region141: #{tpu_custom_call.1} parent=0
    _
  %s21 = ssub.s32 1, %s19
  %s22 = scalar_select 0, %s21, %s19
  $region1: #{tpu_custom_call.1} parent=0
    #allocation2 [shape = 'u8[8192]{0}', space=vmem, size = 0x2000, scoped, tag = 'input window, operand 0']
    #allocation3 [shape = 's32[2]{0}', space=sflag, size = 0x8, scoped, tag = 'scoped memory for tpu_custom_call.1']
    #allocation4 [shape = 's32[2]{0}', space=sflag, size = 0x8, scoped, tag = 'scoped memory for tpu_custom_call.1']
    #allocation5 [shape = 'u8[8192]{0}', space=vmem, size = 0x2000, scoped, tag = 'input window, operand 1']
    #allocation6 [shape = 's32[2]{0}', space=sflag, size = 0x8, scoped, tag = 'scoped memory for tpu_custom_call.1']
    #allocation7 [shape = 'u8[49152]{0}', space=vmem, size = 0xc000, scoped, tag = 'input window, operand 2, single buffered']
    #allocation8 [shape = 'u8[1536]{0}', space=vmem, size = 0x800, scoped, tag = 'input window, operand 3, single buffered']
    #allocation9 [shape = 's32[1]{0}', space=sflag, size = 0x4, scoped, tag = 'scoped memory for tpu_custom_call.1']
    #allocation10 [shape = 'u8[16384]{0}', space=vmem, size = 0x4000, scoped, tag = 'input window, operand 4, single buffered']
    #allocation11 [shape = 'u8[49152]{0}', space=vmem, size = 0xc000, scoped, tag = 'input window, operand 6, single buffered']
    #allocation12 [shape = 's32[1]{0}', space=sflag, size = 0x4, scoped, tag = 'scoped memory for tpu_custom_call.1']
    #allocation13 [shape = 'u8[16384]{0}', space=vmem, size = 0x4000, scoped, tag = 'input window, operand 8, single buffered']
    #allocation14 [shape = 'u8[16384]{0}', space=vmem, size = 0x4000, scoped, tag = 'input window, operand 14, single buffered']
    #allocation15 [shape = 's32[1]{0}', space=sflag, size = 0x4, scoped, tag = 'scoped memory for tpu_custom_call.1']
    #allocation16 [shape = 'u8[16384]{0}', space=vmem, size = 0x4000, scoped, tag = 'input window, operand 16, single buffered']
    #allocation17 [shape = 'u8[8192]{0}', space=vmem, size = 0x2000, scoped, tag = 'output window, operand 0']
    %23 = vsyncpa [#allocation3], 0
    %s24 = scalar_lea.sflag [#allocation3], 1
    %25 = vsyncpa %s24, 0
    %26 = vsyncpa [#allocation6], 0
    %s27 = scalar_lea.sflag [#allocation6], 1
    %28 = vsyncpa %s27, 0
    %29 = vsyncpa [#allocation9], 0
    %30 = vsyncpa [#allocation12], 0
    %31 = vsyncpa [#allocation15], 0
    %32 = vsyncpa [#allocation4], 0
    %s33 = scalar_lea.sflag [#allocation4], 1
    %34 = vsyncpa %s33, 0
    loop: start=0, step=1, limit=4
    $region2: #{tpu_custom_call.1} parent=1 // loop_pre_header
      _
    $region3: #{tpu_custom_call.1} parent=1 // loop_header
      %s36 = sphi 0, %s40
      %p37 = scmp.ge.s32.totalorder %s36, 4
      %s46 = sphi 0, %s48
      %s49 = sphi 0, %s46
      %s50 = sphi 0, %s49
      %s66 = sphi 0, %s50
      %s72 = sphi 0, %s74
      %s75 = sphi 0, %s72
      %s76 = sphi 0, %s75
      %s92 = sphi 0, %s76
      %s96 = sphi 0, %s96
      %s98 = sphi 0, %s96
      %s99 = sphi 0, %s98
      %s113 = sphi 0, %s99
      %s117 = sphi 0, %s117
      %s119 = sphi 0, %s117
      %s120 = sphi 0, %s119
      %s134 = sphi 0, %s120
      %s138 = sphi 0, %s138
      %s140 = sphi 0, %s138
      %s141 = sphi 0, %s140
      %s155 = sphi 0, %s141
      %s159 = sphi 0, %s159
      %s161 = sphi 0, %s159
      %s162 = sphi 0, %s161
      %s176 = sphi 0, %s162
      %s180 = sphi 0, %s180
      %s182 = sphi 0, %s180
      %s183 = sphi 0, %s182
      %s197 = sphi 0, %s183
      %s201 = sphi 0, %s201
      %s203 = sphi 0, %s201
      %s204 = sphi 0, %s203
      %s218 = sphi 0, %s204
      %s222 = sphi 0, %s222
      %s224 = sphi 0, %s222
      %s225 = sphi 0, %s224
      %s239 = sphi 0, %s225
      %s243 = sphi 0, %s243
      %s245 = sphi 0, %s243
      %s246 = sphi 0, %s245
      %s260 = sphi 0, %s246
      %s264 = sphi 0, %s264
      %s266 = sphi 0, %s264
      %s267 = sphi 0, %s266
      %s281 = sphi 0, %s267
      %s285 = sphi 0, %s285
      %s287 = sphi 0, %s285
      %s288 = sphi 0, %s287
      %s302 = sphi 0, %s288
      %s306 = sphi 0, %s306
      %s308 = sphi 0, %s306
      %s309 = sphi 0, %s308
      %s323 = sphi 0, %s309
      %s327 = sphi 0, %s327
      %s329 = sphi 0, %s327
      %s330 = sphi 0, %s329
      %s344 = sphi 0, %s330
      %s348 = sphi 0, %s348
      %s350 = sphi 0, %s348
      %s351 = sphi 0, %s350
      %s365 = sphi 0, %s351
      %s369 = sphi 0, %s369
      %s371 = sphi 0, %s369
      %s372 = sphi 0, %s371
      %s386 = sphi 0, %s372
      %s390 = sphi 0, %s390
      %s392 = sphi 0, %s390
      %s393 = sphi 0, %s392
      %s407 = sphi 0, %s393
      %s411 = sphi 0, %s411
      %s413 = sphi 0, %s411
      %s414 = sphi 0, %s413
      %s428 = sphi 0, %s414
      %s434 = sphi 0, %s436
      %s437 = sphi 0, %s434
      %s438 = sphi 0, %s437
      %s454 = sphi 0, %s438
    $region4: #{tpu_custom_call.1} parent=1 // loop_header_branch
      %39 = sbr.rel (%p37) target = $region8
    $region5: #{tpu_custom_call.1} parent=1 // loop_body
      %s41 = ssub.s32 %s36, 1
      %s42 = ssub.s32 %s36, 2
      %s43 = sadd.s32 %s36, 1
      %s44 = ssub.s32 %s36, %s43
      %p45 = scmp.eq.s32.totalorder %s44, 0
      %s47 = sadd.s32 %s46, 1
      %s48 = scalar_select %p45, %s46, %s47
      %p51 = pneg %p45
      %p52 = scmp.eq.s32.totalorder %s36, 1
      %p53 = por %p51, %p52
      %p54 = scmp.ne.s32.totalorder %s46, %s49
      %p55 = scmp.eq.s32.totalorder %s36, 0
      %p56 = por %p54, %p55
      %p57 = scmp.ne.s32.totalorder %s46, %s49
      %p58 = scmp.eq.s32.totalorder %s41, 1
      %p59 = por %p57, %p58
      %p60 = scmp.ne.s32.totalorder %s49, %s50
      %p61 = scmp.eq.s32.totalorder %s41, 0
      %p62 = por %p60, %p61
      %p63 = scmp.ne.s32.totalorder %s49, %s50
      %p64 = scmp.eq.s32.totalorder %s42, 1
      %p65 = por %p63, %p64
      %p67 = scmp.ne.s32.totalorder %s50, %s66
      %p68 = scmp.eq.s32.totalorder %s42, 0
      %p69 = por %p67, %p68
      %s70 = ssub.s32 %s36, %s43
      %p71 = scmp.eq.s32.totalorder %s70, 0
      %s73 = sadd.s32 %s72, 1
      %s74 = scalar_select %p71, %s72, %s73
      %p77 = pneg %p71
      %p78 = scmp.eq.s32.totalorder %s36, 1
      %p79 = por %p77, %p78
      %p80 = scmp.ne.s32.totalorder %s72, %s75
      %p81 = scmp.eq.s32.totalorder %s36, 0
      %p82 = por %p80, %p81
      %p83 = scmp.ne.s32.totalorder %s72, %s75
      %p84 = scmp.eq.s32.totalorder %s41, 1
      %p85 = por %p83, %p84
      %p86 = scmp.ne.s32.totalorder %s75, %s76
      %p87 = scmp.eq.s32.totalorder %s41, 0
      %p88 = por %p86, %p87
      %p89 = scmp.ne.s32.totalorder %s75, %s76
      %p90 = scmp.eq.s32.totalorder %s42, 1
      %p91 = por %p89, %p90
      %p93 = scmp.ne.s32.totalorder %s76, %s92
      %p94 = scmp.eq.s32.totalorder %s42, 0
      %p95 = por %p93, %p94
      %s97 = sadd.s32 %s96, 1
      %p100 = scmp.eq.s32.totalorder %s36, 1
      %p101 = scmp.ne.s32.totalorder %s96, %s98
      %p102 = scmp.eq.s32.totalorder %s36, 0
      %p103 = por %p101, %p102
      %p104 = scmp.ne.s32.totalorder %s96, %s98
      %p105 = scmp.eq.s32.totalorder %s41, 1
      %p106 = por %p104, %p105
      %p107 = scmp.ne.s32.totalorder %s98, %s99
      %p108 = scmp.eq.s32.totalorder %s41, 0
      %p109 = por %p107, %p108
      %p110 = scmp.ne.s32.totalorder %s98, %s99
      %p111 = scmp.eq.s32.totalorder %s42, 1
      %p112 = por %p110, %p111
      %p114 = scmp.ne.s32.totalorder %s99, %s113
      %p115 = scmp.eq.s32.totalorder %s42, 0
      %p116 = por %p114, %p115
      %s118 = sadd.s32 %s117, 1
      %p121 = scmp.eq.s32.totalorder %s36, 1
      %p122 = scmp.ne.s32.totalorder %s117, %s119
      %p123 = scmp.eq.s32.totalorder %s36, 0
      %p124 = por %p122, %p123
      %p125 = scmp.ne.s32.totalorder %s117, %s119
      %p126 = scmp.eq.s32.totalorder %s41, 1
      %p127 = por %p125, %p126
      %p128 = scmp.ne.s32.totalorder %s119, %s120
      %p129 = scmp.eq.s32.totalorder %s41, 0
      %p130 = por %p128, %p129
      %p131 = scmp.ne.s32.totalorder %s119, %s120
      %p132 = scmp.eq.s32.totalorder %s42, 1
      %p133 = por %p131, %p132
      %p135 = scmp.ne.s32.totalorder %s120, %s134
      %p136 = scmp.eq.s32.totalorder %s42, 0
      %p137 = por %p135, %p136
      %s139 = sadd.s32 %s138, 1
      %p142 = scmp.eq.s32.totalorder %s36, 1
      %p143 = scmp.ne.s32.totalorder %s138, %s140
      %p144 = scmp.eq.s32.totalorder %s36, 0
      %p145 = por %p143, %p144
      %p146 = scmp.ne.s32.totalorder %s138, %s140
      %p147 = scmp.eq.s32.totalorder %s41, 1
      %p148 = por %p146, %p147
      %p149 = scmp.ne.s32.totalorder %s140, %s141
      %p150 = scmp.eq.s32.totalorder %s41, 0
      %p151 = por %p149, %p150
      %p152 = scmp.ne.s32.totalorder %s140, %s141
      %p153 = scmp.eq.s32.totalorder %s42, 1
      %p154 = por %p152, %p153
      %p156 = scmp.ne.s32.totalorder %s141, %s155
      %p157 = scmp.eq.s32.totalorder %s42, 0
      %p158 = por %p156, %p157
      %s160 = sadd.s32 %s159, 1
      %p163 = scmp.eq.s32.totalorder %s36, 1
      %p164 = scmp.ne.s32.totalorder %s159, %s161
      %p165 = scmp.eq.s32.totalorder %s36, 0
      %p166 = por %p164, %p165
      %p167 = scmp.ne.s32.totalorder %s159, %s161
      %p168 = scmp.eq.s32.totalorder %s41, 1
      %p169 = por %p167, %p168
      %p170 = scmp.ne.s32.totalorder %s161, %s162
      %p171 = scmp.eq.s32.totalorder %s41, 0
      %p172 = por %p170, %p171
      %p173 = scmp.ne.s32.totalorder %s161, %s162
      %p174 = scmp.eq.s32.totalorder %s42, 1
      %p175 = por %p173, %p174
      %p177 = scmp.ne.s32.totalorder %s162, %s176
      %p178 = scmp.eq.s32.totalorder %s42, 0
      %p179 = por %p177, %p178
      %s181 = sadd.s32 %s180, 1
      %p184 = scmp.eq.s32.totalorder %s36, 1
      %p185 = scmp.ne.s32.totalorder %s180, %s182
      %p186 = scmp.eq.s32.totalorder %s36, 0
      %p187 = por %p185, %p186
      %p188 = scmp.ne.s32.totalorder %s180, %s182
      %p189 = scmp.eq.s32.totalorder %s41, 1
      %p190 = por %p188, %p189
      %p191 = scmp.ne.s32.totalorder %s182, %s183
      %p192 = scmp.eq.s32.totalorder %s41, 0
      %p193 = por %p191, %p192
      %p194 = scmp.ne.s32.totalorder %s182, %s183
      %p195 = scmp.eq.s32.totalorder %s42, 1
      %p196 = por %p194, %p195
      %p198 = scmp.ne.s32.totalorder %s183, %s197
      %p199 = scmp.eq.s32.totalorder %s42, 0
      %p200 = por %p198, %p199
      %s202 = sadd.s32 %s201, 1
      %p205 = scmp.eq.s32.totalorder %s36, 1
      %p206 = scmp.ne.s32.totalorder %s201, %s203
      %p207 = scmp.eq.s32.totalorder %s36, 0
      %p208 = por %p206, %p207
      %p209 = scmp.ne.s32.totalorder %s201, %s203
      %p210 = scmp.eq.s32.totalorder %s41, 1
      %p211 = por %p209, %p210
      %p212 = scmp.ne.s32.totalorder %s203, %s204
      %p213 = scmp.eq.s32.totalorder %s41, 0
      %p214 = por %p212, %p213
      %p215 = scmp.ne.s32.totalorder %s203, %s204
      %p216 = scmp.eq.s32.totalorder %s42, 1
      %p217 = por %p215, %p216
      %p219 = scmp.ne.s32.totalorder %s204, %s218
      %p220 = scmp.eq.s32.totalorder %s42, 0
      %p221 = por %p219, %p220
      %s223 = sadd.s32 %s222, 1
      %p226 = scmp.eq.s32.totalorder %s36, 1
      %p227 = scmp.ne.s32.totalorder %s222, %s224
      %p228 = scmp.eq.s32.totalorder %s36, 0
      %p229 = por %p227, %p228
      %p230 = scmp.ne.s32.totalorder %s222, %s224
      %p231 = scmp.eq.s32.totalorder %s41, 1
      %p232 = por %p230, %p231
      %p233 = scmp.ne.s32.totalorder %s224, %s225
      %p234 = scmp.eq.s32.totalorder %s41, 0
      %p235 = por %p233, %p234
      %p236 = scmp.ne.s32.totalorder %s224, %s225
      %p237 = scmp.eq.s32.totalorder %s42, 1
      %p238 = por %p236, %p237
      %p240 = scmp.ne.s32.totalorder %s225, %s239
      %p241 = scmp.eq.s32.totalorder %s42, 0
      %p242 = por %p240, %p241
      %s244 = sadd.s32 %s243, 1
      %p247 = scmp.eq.s32.totalorder %s36, 1
      %p248 = scmp.ne.s32.totalorder %s243, %s245
      %p249 = scmp.eq.s32.totalorder %s36, 0
      %p250 = por %p248, %p249
      %p251 = scmp.ne.s32.totalorder %s243, %s245
      %p252 = scmp.eq.s32.totalorder %s41, 1
      %p253 = por %p251, %p252
      %p254 = scmp.ne.s32.totalorder %s245, %s246
      %p255 = scmp.eq.s32.totalorder %s41, 0
      %p256 = por %p254, %p255
      %p257 = scmp.ne.s32.totalorder %s245, %s246
      %p258 = scmp.eq.s32.totalorder %s42, 1
      %p259 = por %p257, %p258
      %p261 = scmp.ne.s32.totalorder %s246, %s260
      %p262 = scmp.eq.s32.totalorder %s42, 0
      %p263 = por %p261, %p262
      %s265 = sadd.s32 %s264, 1
      %p268 = scmp.eq.s32.totalorder %s36, 1
      %p269 = scmp.ne.s32.totalorder %s264, %s266
      %p270 = scmp.eq.s32.totalorder %s36, 0
      %p271 = por %p269, %p270
      %p272 = scmp.ne.s32.totalorder %s264, %s266
      %p273 = scmp.eq.s32.totalorder %s41, 1
      %p274 = por %p272, %p273
      %p275 = scmp.ne.s32.totalorder %s266, %s267
      %p276 = scmp.eq.s32.totalorder %s41, 0
      %p277 = por %p275, %p276
      %p278 = scmp.ne.s32.totalorder %s266, %s267
      %p279 = scmp.eq.s32.totalorder %s42, 1
      %p280 = por %p278, %p279
      %p282 = scmp.ne.s32.totalorder %s267, %s281
      %p283 = scmp.eq.s32.totalorder %s42, 0
      %p284 = por %p282, %p283
      %s286 = sadd.s32 %s285, 1
      %p289 = scmp.eq.s32.totalorder %s36, 1
      %p290 = scmp.ne.s32.totalorder %s285, %s287
      %p291 = scmp.eq.s32.totalorder %s36, 0
      %p292 = por %p290, %p291
      %p293 = scmp.ne.s32.totalorder %s285, %s287
      %p294 = scmp.eq.s32.totalorder %s41, 1
      %p295 = por %p293, %p294
      %p296 = scmp.ne.s32.totalorder %s287, %s288
      %p297 = scmp.eq.s32.totalorder %s41, 0
      %p298 = por %p296, %p297
      %p299 = scmp.ne.s32.totalorder %s287, %s288
      %p300 = scmp.eq.s32.totalorder %s42, 1
      %p301 = por %p299, %p300
      %p303 = scmp.ne.s32.totalorder %s288, %s302
      %p304 = scmp.eq.s32.totalorder %s42, 0
      %p305 = por %p303, %p304
      %s307 = sadd.s32 %s306, 1
      %p310 = scmp.eq.s32.totalorder %s36, 1
      %p311 = scmp.ne.s32.totalorder %s306, %s308
      %p312 = scmp.eq.s32.totalorder %s36, 0
      %p313 = por %p311, %p312
      %p314 = scmp.ne.s32.totalorder %s306, %s308
      %p315 = scmp.eq.s32.totalorder %s41, 1
      %p316 = por %p314, %p315
      %p317 = scmp.ne.s32.totalorder %s308, %s309
      %p318 = scmp.eq.s32.totalorder %s41, 0
      %p319 = por %p317, %p318
      %p320 = scmp.ne.s32.totalorder %s308, %s309
      %p321 = scmp.eq.s32.totalorder %s42, 1
      %p322 = por %p320, %p321
      %p324 = scmp.ne.s32.totalorder %s309, %s323
      %p325 = scmp.eq.s32.totalorder %s42, 0
      %p326 = por %p324, %p325
      %s328 = sadd.s32 %s327, 1
      %p331 = scmp.eq.s32.totalorder %s36, 1
      %p332 = scmp.ne.s32.totalorder %s327, %s329
      %p333 = scmp.eq.s32.totalorder %s36, 0
      %p334 = por %p332, %p333
      %p335 = scmp.ne.s32.totalorder %s327, %s329
      %p336 = scmp.eq.s32.totalorder %s41, 1
      %p337 = por %p335, %p336
      %p338 = scmp.ne.s32.totalorder %s329, %s330
      %p339 = scmp.eq.s32.totalorder %s41, 0
      %p340 = por %p338, %p339
      %p341 = scmp.ne.s32.totalorder %s329, %s330
      %p342 = scmp.eq.s32.totalorder %s42, 1
      %p343 = por %p341, %p342
      %p345 = scmp.ne.s32.totalorder %s330, %s344
      %p346 = scmp.eq.s32.totalorder %s42, 0
      %p347 = por %p345, %p346
      %s349 = sadd.s32 %s348, 1
      %p352 = scmp.eq.s32.totalorder %s36, 1
      %p353 = scmp.ne.s32.totalorder %s348, %s350
      %p354 = scmp.eq.s32.totalorder %s36, 0
      %p355 = por %p353, %p354
      %p356 = scmp.ne.s32.totalorder %s348, %s350
      %p357 = scmp.eq.s32.totalorder %s41, 1
      %p358 = por %p356, %p357
      %p359 = scmp.ne.s32.totalorder %s350, %s351
      %p360 = scmp.eq.s32.totalorder %s41, 0
      %p361 = por %p359, %p360
      %p362 = scmp.ne.s32.totalorder %s350, %s351
      %p363 = scmp.eq.s32.totalorder %s42, 1
      %p364 = por %p362, %p363
      %p366 = scmp.ne.s32.totalorder %s351, %s365
      %p367 = scmp.eq.s32.totalorder %s42, 0
      %p368 = por %p366, %p367
      %s370 = sadd.s32 %s369, 1
      %p373 = scmp.eq.s32.totalorder %s36, 1
      %p374 = scmp.ne.s32.totalorder %s369, %s371
      %p375 = scmp.eq.s32.totalorder %s36, 0
      %p376 = por %p374, %p375
      %p377 = scmp.ne.s32.totalorder %s369, %s371
      %p378 = scmp.eq.s32.totalorder %s41, 1
      %p379 = por %p377, %p378
      %p380 = scmp.ne.s32.totalorder %s371, %s372
      %p381 = scmp.eq.s32.totalorder %s41, 0
      %p382 = por %p380, %p381
      %p383 = scmp.ne.s32.totalorder %s371, %s372
      %p384 = scmp.eq.s32.totalorder %s42, 1
      %p385 = por %p383, %p384
      %p387 = scmp.ne.s32.totalorder %s372, %s386
      %p388 = scmp.eq.s32.totalorder %s42, 0
      %p389 = por %p387, %p388
      %s391 = sadd.s32 %s390, 1
      %p394 = scmp.eq.s32.totalorder %s36, 1
      %p395 = scmp.ne.s32.totalorder %s390, %s392
      %p396 = scmp.eq.s32.totalorder %s36, 0
      %p397 = por %p395, %p396
      %p398 = scmp.ne.s32.totalorder %s390, %s392
      %p399 = scmp.eq.s32.totalorder %s41, 1
      %p400 = por %p398, %p399
      %p401 = scmp.ne.s32.totalorder %s392, %s393
      %p402 = scmp.eq.s32.totalorder %s41, 0
      %p403 = por %p401, %p402
      %p404 = scmp.ne.s32.totalorder %s392, %s393
      %p405 = scmp.eq.s32.totalorder %s42, 1
      %p406 = por %p404, %p405
      %p408 = scmp.ne.s32.totalorder %s393, %s407
      %p409 = scmp.eq.s32.totalorder %s42, 0
      %p410 = por %p408, %p409
      %s412 = sadd.s32 %s411, 1
      %p415 = scmp.eq.s32.totalorder %s36, 1
      %p416 = scmp.ne.s32.totalorder %s411, %s413
      %p417 = scmp.eq.s32.totalorder %s36, 0
      %p418 = por %p416, %p417
      %p419 = scmp.ne.s32.totalorder %s411, %s413
      %p420 = scmp.eq.s32.totalorder %s41, 1
      %p421 = por %p419, %p420
      %p422 = scmp.ne.s32.totalorder %s413, %s414
      %p423 = scmp.eq.s32.totalorder %s41, 0
      %p424 = por %p422, %p423
      %p425 = scmp.ne.s32.totalorder %s413, %s414
      %p426 = scmp.eq.s32.totalorder %s42, 1
      %p427 = por %p425, %p426
      %p429 = scmp.ne.s32.totalorder %s414, %s428
      %p430 = scmp.eq.s32.totalorder %s42, 0
      %p431 = por %p429, %p430
      %s432 = ssub.s32 %s36, %s43
      %p433 = scmp.eq.s32.totalorder %s432, 0
      %s435 = sadd.s32 %s434, 1
      %s436 = scalar_select %p433, %s434, %s435
      %p439 = pneg %p433
      %p440 = scmp.eq.s32.totalorder %s36, 1
      %p441 = por %p439, %p440
      %p442 = scmp.ne.s32.totalorder %s434, %s437
      %p443 = scmp.eq.s32.totalorder %s36, 0
      %p444 = por %p442, %p443
      %p445 = scmp.ne.s32.totalorder %s434, %s437
      %p446 = scmp.eq.s32.totalorder %s41, 1
      %p447 = por %p445, %p446
      %p448 = scmp.ne.s32.totalorder %s437, %s438
      %p449 = scmp.eq.s32.totalorder %s41, 0
      %p450 = por %p448, %p449
      %p451 = scmp.ne.s32.totalorder %s437, %s438
      %p452 = scmp.eq.s32.totalorder %s42, 1
      %p453 = por %p451, %p452
      %p455 = scmp.ne.s32.totalorder %s438, %s454
      %p456 = scmp.eq.s32.totalorder %s42, 0
      %p457 = por %p455, %p456
      %p458 = scmp.le.s32.totalorder 1, %s36
      %p459 = scmp.lt.s32.totalorder %s36, 3
      %p460 = pnand %p458, %p459
      %p461 = pneg %p460
      // Predicated region
      $region9: #{tpu_custom_call.1} parent=5 // pred_check
        _
      $region10: #{tpu_custom_call.1} parent=5 // pred_check_branch
        %463 = sbr.rel (%p460) target = $region12
      $region11: #{tpu_custom_call.1} parent=5 // pred_region
        %s464 = ssub.s32 %s36, 1
        // Predicated region
        $region13: #{tpu_custom_call.1} parent=11 // pred_check
          %p465 = pneg %p109
        $region14: #{tpu_custom_call.1} parent=11 // pred_check_branch
          %467 = sbr.rel (%p465) target = $region16
        $region15: #{tpu_custom_call.1} parent=11 // pred_region
          %469 = vsyncadd [#allocation6], 0
          %s470 = sshll.u32 %s2, 4
          %s471 = int_to_ptr.hbm [resolvable:$true] %s470
          %s472 = sshll.u32 [#allocation7], 4
          %s473 = int_to_ptr.vmem [resolvable:$true] %s472
          %478 = dma.hbm_to_vmem [thread:$0]  %s471, 1536, %s473, [#allocation6], 128, 128, 8
        $region16: #{tpu_custom_call.1} parent=11 // pred_fallthru
          _
        // Predicated region
        $region17: #{tpu_custom_call.1} parent=11 // pred_check
          %p479 = pneg %p130
        $region18: #{tpu_custom_call.1} parent=11 // pred_check_branch
          %481 = sbr.rel (%p479) target = $region20
        $region19: #{tpu_custom_call.1} parent=11 // pred_region
          %483 = vsyncadd [#allocation9], 0
          %s484 = sshll.u32 %s3, 4
          %s485 = int_to_ptr.hbm [resolvable:$true] %s484
          %s486 = sshll.u32 [#allocation8], 4
          %s487 = int_to_ptr.vmem [resolvable:$true] %s486
          %492 = dma.hbm_to_vmem [thread:$0]  %s485, 48, %s487, [#allocation9], 16, 16, 1
        $region20: #{tpu_custom_call.1} parent=11 // pred_fallthru
          _
        // Predicated region
        $region21: #{tpu_custom_call.1} parent=11 // pred_check
          %p493 = pneg %p151
        $region22: #{tpu_custom_call.1} parent=11 // pred_check_branch
          %495 = sbr.rel (%p493) target = $region24
        $region23: #{tpu_custom_call.1} parent=11 // pred_region
          %497 = vsyncadd [#allocation9], 0
          %s498 = sshll.u32 %s4, 4
          %s499 = int_to_ptr.hbm [resolvable:$true] %s498
          %s500 = sshll.u32 [#allocation10], 4
          %s501 = int_to_ptr.vmem [resolvable:$true] %s500
          %506 = dma.hbm_to_vmem [thread:$0]  %s499, 512, %s501, [#allocation9], 128, 128, 8
        $region24: #{tpu_custom_call.1} parent=11 // pred_fallthru
          _
        // Predicated region
        $region25: #{tpu_custom_call.1} parent=11 // pred_check
          %p507 = pneg %p172
        $region26: #{tpu_custom_call.1} parent=11 // pred_check_branch
          %509 = sbr.rel (%p507) target = $region28
        $region27: #{tpu_custom_call.1} parent=11 // pred_region
          _
        $region28: #{tpu_custom_call.1} parent=11 // pred_fallthru
          _
        // Predicated region
        $region29: #{tpu_custom_call.1} parent=11 // pred_check
          %p510 = pneg %p193
        $region30: #{tpu_custom_call.1} parent=11 // pred_check_branch
          %512 = sbr.rel (%p510) target = $region32
        $region31: #{tpu_custom_call.1} parent=11 // pred_region
          %514 = vsyncadd [#allocation12], 0
          %s515 = sshll.u32 %s6, 4
          %s516 = int_to_ptr.hbm [resolvable:$true] %s515
          %s517 = sshll.u32 [#allocation11], 4
          %s518 = int_to_ptr.vmem [resolvable:$true] %s517
          %523 = dma.hbm_to_vmem [thread:$0]  %s516, 1536, %s518, [#allocation12], 128, 128, 8
        $region32: #{tpu_custom_call.1} parent=11 // pred_fallthru
          _
        // Predicated region
        $region33: #{tpu_custom_call.1} parent=11 // pred_check
          %p524 = pneg %p214
        $region34: #{tpu_custom_call.1} parent=11 // pred_check_branch
          %526 = sbr.rel (%p524) target = $region36
        $region35: #{tpu_custom_call.1} parent=11 // pred_region
          _
        $region36: #{tpu_custom_call.1} parent=11 // pred_fallthru
          _
        // Predicated region
        $region37: #{tpu_custom_call.1} parent=11 // pred_check
          %p527 = pneg %p235
        $region38: #{tpu_custom_call.1} parent=11 // pred_check_branch
          %529 = sbr.rel (%p527) target = $region40
        $region39: #{tpu_custom_call.1} parent=11 // pred_region
          %531 = vsyncadd [#allocation12], 0
          %s532 = sshll.u32 %s8, 4
          %s533 = int_to_ptr.hbm [resolvable:$true] %s532
          %s534 = sshll.u32 [#allocation13], 4
          %s535 = int_to_ptr.vmem [resolvable:$true] %s534
          %540 = dma.hbm_to_vmem [thread:$0]  %s533, 512, %s535, [#allocation12], 128, 128, 8
        $region40: #{tpu_custom_call.1} parent=11 // pred_fallthru
          _
        // Predicated region
        $region41: #{tpu_custom_call.1} parent=11 // pred_check
          %p541 = pneg %p256
        $region42: #{tpu_custom_call.1} parent=11 // pred_check_branch
          %543 = sbr.rel (%p541) target = $region44
        $region43: #{tpu_custom_call.1} parent=11 // pred_region
          _
        $region44: #{tpu_custom_call.1} parent=11 // pred_fallthru
          _
        // Predicated region
        $region45: #{tpu_custom_call.1} parent=11 // pred_check
          %p544 = pneg %p277
        $region46: #{tpu_custom_call.1} parent=11 // pred_check_branch
          %546 = sbr.rel (%p544) target = $region48
        $region47: #{tpu_custom_call.1} parent=11 // pred_region
          _
        $region48: #{tpu_custom_call.1} parent=11 // pred_fallthru
          _
        // Predicated region
        $region49: #{tpu_custom_call.1} parent=11 // pred_check
          %p547 = pneg %p298
        $region50: #{tpu_custom_call.1} parent=11 // pred_check_branch
          %549 = sbr.rel (%p547) target = $region52
        $region51: #{tpu_custom_call.1} parent=11 // pred_region
          _
        $region52: #{tpu_custom_call.1} parent=11 // pred_fallthru
          _
        // Predicated region
        $region53: #{tpu_custom_call.1} parent=11 // pred_check
          %p550 = pneg %p319
        $region54: #{tpu_custom_call.1} parent=11 // pred_check_branch
          %552 = sbr.rel (%p550) target = $region56
        $region55: #{tpu_custom_call.1} parent=11 // pred_region
          _
        $region56: #{tpu_custom_call.1} parent=11 // pred_fallthru
          _
        // Predicated region
        $region57: #{tpu_custom_call.1} parent=11 // pred_check
          %p553 = pneg %p340
        $region58: #{tpu_custom_call.1} parent=11 // pred_check_branch
          %555 = sbr.rel (%p553) target = $region60
        $region59: #{tpu_custom_call.1} parent=11 // pred_region
          _
        $region60: #{tpu_custom_call.1} parent=11 // pred_fallthru
          _
        // Predicated region
        $region61: #{tpu_custom_call.1} parent=11 // pred_check
          %p556 = pneg %p361
        $region62: #{tpu_custom_call.1} parent=11 // pred_check_branch
          %558 = sbr.rel (%p556) target = $region64
        $region63: #{tpu_custom_call.1} parent=11 // pred_region
          %560 = vsyncadd [#allocation15], 0
          %s561 = sshll.u32 %s14, 4
          %s562 = int_to_ptr.hbm [resolvable:$true] %s561
          %s563 = sshll.u32 [#allocation14], 4
          %s564 = int_to_ptr.vmem [resolvable:$true] %s563
          %569 = dma.hbm_to_vmem [thread:$0]  %s562, 512, %s564, [#allocation15], 128, 128, 8
        $region64: #{tpu_custom_call.1} parent=11 // pred_fallthru
          _
        // Predicated region
        $region65: #{tpu_custom_call.1} parent=11 // pred_check
          %p570 = pneg %p382
        $region66: #{tpu_custom_call.1} parent=11 // pred_check_branch
          %572 = sbr.rel (%p570) target = $region68
        $region67: #{tpu_custom_call.1} parent=11 // pred_region
          _
        $region68: #{tpu_custom_call.1} parent=11 // pred_fallthru
          _
        // Predicated region
        $region69: #{tpu_custom_call.1} parent=11 // pred_check
          %p573 = pneg %p403
        $region70: #{tpu_custom_call.1} parent=11 // pred_check_branch
          %575 = sbr.rel (%p573) target = $region72
        $region71: #{tpu_custom_call.1} parent=11 // pred_region
          %577 = vsyncadd [#allocation15], 0
          %s578 = sshll.u32 %s16, 4
          %s579 = int_to_ptr.hbm [resolvable:$true] %s578
          %s580 = sshll.u32 [#allocation16], 4
          %s581 = int_to_ptr.vmem [resolvable:$true] %s580
          %586 = dma.hbm_to_vmem [thread:$0]  %s579, 512, %s581, [#allocation15], 128, 128, 8
        $region72: #{tpu_custom_call.1} parent=11 // pred_fallthru
          _
        // Predicated region
        $region73: #{tpu_custom_call.1} parent=11 // pred_check
          %p587 = pneg %p424
        $region74: #{tpu_custom_call.1} parent=11 // pred_check_branch
          %589 = sbr.rel (%p587) target = $region76
        $region75: #{tpu_custom_call.1} parent=11 // pred_region
          _
        $region76: #{tpu_custom_call.1} parent=11 // pred_fallthru
          _
      $region12: #{tpu_custom_call.1} parent=5 // pred_fallthru
        _
      %p590 = scmp.lt.s32.totalorder %s36, 2
      // Predicated region
      $region77: #{tpu_custom_call.1} parent=5 // pred_check
        %p591 = pneg %p590
      $region78: #{tpu_custom_call.1} parent=5 // pred_check_branch
        %593 = sbr.rel (%p591) target = $region80
      $region79: #{tpu_custom_call.1} parent=5 // pred_region
        // Predicated region
        $region81: #{tpu_custom_call.1} parent=79 // pred_check
          %p594 = pneg %p56
        $region82: #{tpu_custom_call.1} parent=79 // pred_check_branch
          %596 = sbr.rel (%p594) target = $region84
        $region83: #{tpu_custom_call.1} parent=79 // pred_region
          %s597 = sand.u32 %s46, 1
          %s598 = scalar_lea.sflag [#allocation3], %s597
          %s599 = sand.u32 %s46, 1
          %s600 = smul.addr %s599, 8
          %s601 = scalar_lea.vmem [#allocation2], %s600
          %603 = vsyncadd %s598, 0
          %s604 = smul.addr %s36, 8
          %s605 = scalar_lea.hbm %s0, %s604
          %s607 = sshll.u32 %s605, 4
          %s608 = int_to_ptr.hbm [resolvable:$true] %s607
          %s609 = sshll.u32 %s601, 4
          %s610 = int_to_ptr.vmem [resolvable:$true] %s609
          %612 = dma.hbm_to_vmem [thread:$0]  %s608, 128, %s610, %s598
        $region84: #{tpu_custom_call.1} parent=79 // pred_fallthru
          _
        // Predicated region
        $region85: #{tpu_custom_call.1} parent=79 // pred_check
          %p613 = pneg %p82
        $region86: #{tpu_custom_call.1} parent=79 // pred_check_branch
          %615 = sbr.rel (%p613) target = $region88
        $region87: #{tpu_custom_call.1} parent=79 // pred_region
          %s616 = sand.u32 %s36, 1
          %s617 = scalar_lea.sflag [#allocation6], %s616
          %s618 = sand.u32 %s72, 1
          %s619 = smul.addr %s618, 8
          %s620 = scalar_lea.vmem [#allocation5], %s619
          %622 = vsyncadd %s617, 0
          %s623 = smul.addr %s36, 8
          %s624 = scalar_lea.hbm %s1, %s623
          %s626 = sshll.u32 %s624, 4
          %s627 = int_to_ptr.hbm [resolvable:$true] %s626
          %s628 = sshll.u32 %s620, 4
          %s629 = int_to_ptr.vmem [resolvable:$true] %s628
          %631 = dma.hbm_to_vmem [thread:$0]  %s627, 128, %s629, %s617
        $region88: #{tpu_custom_call.1} parent=79 // pred_fallthru
          _
      $region80: #{tpu_custom_call.1} parent=5 // pred_fallthru
        _
      %p632 = scmp.le.s32.totalorder 1, %s36
      %p633 = scmp.lt.s32.totalorder %s36, 3
      %p634 = pnand %p632, %p633
      %p635 = pneg %p634
      // Predicated region
      $region89: #{tpu_custom_call.1} parent=5 // pred_check
        _
      $region90: #{tpu_custom_call.1} parent=5 // pred_check_branch
        %637 = sbr.rel (%p634) target = $region92
      $region91: #{tpu_custom_call.1} parent=5 // pred_region
        %s638 = ssub.s32 %s36, 1
        %s639 = sand.u32 %s49, 1
        %s640 = scalar_lea.sflag [#allocation3], %s639
        %s641 = sand.u32 %s49, 1
        %s642 = smul.addr %s641, 8
        %s643 = scalar_lea.vmem [#allocation2], %s642
        // Predicated region
        $region93: #{tpu_custom_call.1} parent=91 // pred_check
          %p644 = pneg %p62
        $region94: #{tpu_custom_call.1} parent=91 // pred_check_branch
          %646 = sbr.rel (%p644) target = $region96
        $region95: #{tpu_custom_call.1} parent=91 // pred_region
          %648 = dma.done %s640, 128
        $region96: #{tpu_custom_call.1} parent=91 // pred_fallthru
          _
        %s649 = sand.u32 %s41, 1
        %s650 = scalar_lea.sflag [#allocation6], %s649
        %s651 = sand.u32 %s75, 1
        %s652 = smul.addr %s651, 8
        %s653 = scalar_lea.vmem [#allocation5], %s652
        // Predicated region
        $region97: #{tpu_custom_call.1} parent=91 // pred_check
          %p654 = pneg %p88
        $region98: #{tpu_custom_call.1} parent=91 // pred_check_branch
          %656 = sbr.rel (%p654) target = $region100
        $region99: #{tpu_custom_call.1} parent=91 // pred_region
          %658 = dma.done %s650, 128
        $region100: #{tpu_custom_call.1} parent=91 // pred_fallthru
          _
        // Predicated region
        $region101: #{tpu_custom_call.1} parent=91 // pred_check
          %p659 = pneg %p109
        $region102: #{tpu_custom_call.1} parent=91 // pred_check_branch
          %661 = sbr.rel (%p659) target = $region104
        $region103: #{tpu_custom_call.1} parent=91 // pred_region
          %663 = dma.done [#allocation6], 1536
        $region104: #{tpu_custom_call.1} parent=91 // pred_fallthru
          _
        // Predicated region
        $region105: #{tpu_custom_call.1} parent=91 // pred_check
          %p664 = pneg %p130
        $region106: #{tpu_custom_call.1} parent=91 // pred_check_branch
          %666 = sbr.rel (%p664) target = $region108
        $region107: #{tpu_custom_call.1} parent=91 // pred_region
          %668 = dma.done [#allocation9], 48
        $region108: #{tpu_custom_call.1} parent=91 // pred_fallthru
          _
        // Predicated region
        $region109: #{tpu_custom_call.1} parent=91 // pred_check
          %p669 = pneg %p151
        $region110: #{tpu_custom_call.1} parent=91 // pred_check_branch
          %671 = sbr.rel (%p669) target = $region112
        $region111: #{tpu_custom_call.1} parent=91 // pred_region
          %673 = dma.done [#allocation9], 512
        $region112: #{tpu_custom_call.1} parent=91 // pred_fallthru
          _
        // Predicated region
        $region113: #{tpu_custom_call.1} parent=91 // pred_check
          %p674 = pneg %p193
        $region114: #{tpu_custom_call.1} parent=91 // pred_check_branch
          %676 = sbr.rel (%p674) target = $region116
        $region115: #{tpu_custom_call.1} parent=91 // pred_region
          %678 = dma.done [#allocation12], 1536
        $region116: #{tpu_custom_call.1} parent=91 // pred_fallthru
          _
        // Predicated region
        $region117: #{tpu_custom_call.1} parent=91 // pred_check
          %p679 = pneg %p235
        $region118: #{tpu_custom_call.1} parent=91 // pred_check_branch
          %681 = sbr.rel (%p679) target = $region120
        $region119: #{tpu_custom_call.1} parent=91 // pred_region
          %683 = dma.done [#allocation12], 512
        $region120: #{tpu_custom_call.1} parent=91 // pred_fallthru
          _
        // Predicated region
        $region121: #{tpu_custom_call.1} parent=91 // pred_check
          %p684 = pneg %p361
        $region122: #{tpu_custom_call.1} parent=91 // pred_check_branch
          %686 = sbr.rel (%p684) target = $region124
        $region123: #{tpu_custom_call.1} parent=91 // pred_region
          %688 = dma.done [#allocation15], 512
        $region124: #{tpu_custom_call.1} parent=91 // pred_fallthru
          _
        // Predicated region
        $region125: #{tpu_custom_call.1} parent=91 // pred_check
          %p689 = pneg %p403
        $region126: #{tpu_custom_call.1} parent=91 // pred_check_branch
          %691 = sbr.rel (%p689) target = $region128
        $region127: #{tpu_custom_call.1} parent=91 // pred_region
          %693 = dma.done [#allocation15], 512
        $region128: #{tpu_custom_call.1} parent=91 // pred_fallthru
          _
        %s694 = sand.u32 %s49, 1
        %s695 = scalar_lea.sflag [#allocation3], %s694
        %s696 = sand.u32 %s49, 1
        %s697 = smul.addr %s696, 8
        %s698 = scalar_lea.vmem [#allocation2], %s697
        %p699 = pneg %p62
        %p700 = pneg %p59
        %s701 = sand.u32 %s41, 1
        %s702 = scalar_lea.sflag [#allocation6], %s701
        %s703 = sand.u32 %s75, 1
        %s704 = smul.addr %s703, 8
        %s705 = scalar_lea.vmem [#allocation5], %s704
        %p706 = pneg %p88
        %p707 = pneg %p85
        %p708 = pneg %p109
        %p709 = pneg %p106
        %p710 = pneg %p130
        %p711 = pneg %p127
        %p712 = pneg %p151
        %p713 = pneg %p148
        %p714 = pneg %p172
        %p715 = pneg %p169
        %p716 = pneg %p193
        %p717 = pneg %p190
        %p718 = pneg %p214
        %p719 = pneg %p211
        %p720 = pneg %p235
        %p721 = pneg %p232
        %p722 = pneg %p256
        %p723 = pneg %p253
        %p724 = pneg %p277
        %p725 = pneg %p274
        %p726 = pneg %p298
        %p727 = pneg %p295
        %p728 = pneg %p319
        %p729 = pneg %p316
        %p730 = pneg %p340
        %p731 = pneg %p337
        %p732 = pneg %p361
        %p733 = pneg %p358
        %p734 = pneg %p382
        %p735 = pneg %p379
        %p736 = pneg %p403
        %p737 = pneg %p400
        %p738 = pneg %p424
        %p739 = pneg %p421
        %p740 = pneg %p450
        %p741 = pneg %p447
        %s742 = sand.u32 %s437, 1
        %s743 = scalar_lea.sflag [#allocation4], %s742
        %s744 = sand.u32 %s437, 1
        %s745 = smul.addr %s744, 8
        %s746 = scalar_lea.vmem [#allocation17], %s745
        %v747 = vld [vmem:[%s643] sm:$0xff]
        %v748 = vld [vmem:[#allocation7] sm:$0xff]
        %v749 = vld [vmem:[#allocation7 + $0x8] sm:$0xff]
        %v750 = vld [vmem:[#allocation7 + $0x10] sm:$0xff]
        %v751 = vld [vmem:[#allocation7 + $0x18] sm:$0xff]
        %v752 = vld [vmem:[#allocation8] sm:$0x1]
        %v754 = vperm.slane %v752, 0
        %vm756 = vcmask 261120
        %v758 = vsel %vm756, %v747, 0
        %760 = vmatpush.msra.mxu0 0.0
        %761 = vmatpush.msra.mxu0 0.0
        %762 = vmatpush.msra.mxu0 0.0
        %763 = vmatpush.msra.mxu0 0.0
        %764 = vmatpush.msra.mxu0 0.0
        %765 = vmatpush.msra.mxu0 0.0
        %766 = vmatpush.msra.mxu0 0.0
        %767 = vmatpush.msra.mxu0 0.0
        %768 = vmatpush.msra.mxu0 0.0
        %769 = vmatpush.msra.mxu0 0.0
        %770 = vmatpush.msra.mxu0 0.0
        %771 = vmatpush.msra.mxu0 0.0
        %772 = vmatpush.msra.mxu0 %v751
        %773 = vmatpush.msra.mxu0 %v750
        %774 = vmatpush.msra.mxu0 %v749
        %775 = vmatpush.msra.mxu0 %v748
        %776 = vmatmul.f32.gmra.mxu0 %v758
        %v777 = vpop.f32.mrf.mxu0
        %v778 = vadd.f32 %v754, %v777
        %779 = vdwg.mxu0
        %v780 = vmul.f32 %v778, 0.35355338
        %s781 = scalar_lea.vmem [#allocation7], 32
        %v782 = vld [vmem:[%s781] sm:$0xff]
        %v783 = vld [vmem:[%s781 + $0x8] sm:$0xff]
        %v784 = vld [vmem:[%s781 + $0x10] sm:$0xff]
        %v785 = vld [vmem:[%s781 + $0x18] sm:$0xff]
        %s786 = scalar_lea.vmem [#allocation8], 1
        %v787 = vld [vmem:[%s786] sm:$0x1]
        %v789 = vperm.slane %v787, 0
        %791 = vmatpush.msra.mxu0 0.0
        %792 = vmatpush.msra.mxu0 0.0
        %793 = vmatpush.msra.mxu0 0.0
        %794 = vmatpush.msra.mxu0 0.0
        %795 = vmatpush.msra.mxu0 0.0
        %796 = vmatpush.msra.mxu0 0.0
        %797 = vmatpush.msra.mxu0 0.0
        %798 = vmatpush.msra.mxu0 0.0
        %799 = vmatpush.msra.mxu0 0.0
        %800 = vmatpush.msra.mxu0 0.0
        %801 = vmatpush.msra.mxu0 0.0
        %802 = vmatpush.msra.mxu0 0.0
        %803 = vmatpush.msra.mxu0 %v785
        %804 = vmatpush.msra.mxu0 %v784
        %805 = vmatpush.msra.mxu0 %v783
        %806 = vmatpush.msra.mxu0 %v782
        %807 = vmatmul.f32.gmra.mxu0 %v758
        %v808 = vpop.f32.mrf.mxu0
        %v809 = vadd.f32 %v789, %v808
        %810 = vdwg.mxu0
        %s811 = scalar_lea.vmem [#allocation7], 64
        %v812 = vld [vmem:[%s811] sm:$0xff]
        %v813 = vld [vmem:[%s811 + $0x8] sm:$0xff]
        %v814 = vld [vmem:[%s811 + $0x10] sm:$0xff]
        %v815 = vld [vmem:[%s811 + $0x18] sm:$0xff]
        %s816 = scalar_lea.vmem [#allocation8], 2
        %v817 = vld [vmem:[%s816] sm:$0x1]
        %v819 = vperm.slane %v817, 0
        %821 = vmatpush.msra.mxu0 0.0
        %822 = vmatpush.msra.mxu0 0.0
        %823 = vmatpush.msra.mxu0 0.0
        %824 = vmatpush.msra.mxu0 0.0
        %825 = vmatpush.msra.mxu0 0.0
        %826 = vmatpush.msra.mxu0 0.0
        %827 = vmatpush.msra.mxu0 0.0
        %828 = vmatpush.msra.mxu0 0.0
        %829 = vmatpush.msra.mxu0 0.0
        %830 = vmatpush.msra.mxu0 0.0
        %831 = vmatpush.msra.mxu0 0.0
        %832 = vmatpush.msra.mxu0 0.0
        %833 = vmatpush.msra.mxu0 %v815
        %834 = vmatpush.msra.mxu0 %v814
        %835 = vmatpush.msra.mxu0 %v813
        %836 = vmatpush.msra.mxu0 %v812
        %837 = vmatmul.f32.gmra.mxu0 %v758
        %v838 = vpop.f32.mrf.mxu0
        %v839 = vadd.f32 %v819, %v838
        %840 = vdwg.mxu0
        %vm841 = vcmask 64512
        %v843 = vsel %vm841, %v780, 0
        %v846 = vsel %vm841, %v809, 0
        %848 = vmatpush.xpose.msra.mxu0 0.0
        %849 = vmatpush.xpose.msra.mxu0 0.0
        %850 = vmatpush.xpose.msra.mxu0 0.0
        %851 = vmatpush.xpose.msra.mxu0 0.0
        %852 = vmatpush.xpose.msra.mxu0 0.0
        %853 = vmatpush.xpose.msra.mxu0 0.0
        %854 = vmatpush.xpose.msra.mxu0 0.0
        %855 = vmatpush.xpose.msra.mxu0 0.0
        %856 = vmatpush.xpose.msra.mxu0 0.0
        %857 = vmatpush.xpose.msra.mxu0 0.0
        %858 = vmatpush.xpose.msra.mxu0 0.0
        %859 = vmatpush.xpose.msra.mxu0 0.0
        %860 = vmatpush.xpose.msra.mxu0 0.0
        %861 = vmatpush.xpose.msra.mxu0 0.0
        %862 = vmatpush.xpose.msra.mxu0 0.0
        %863 = vmatpush.xpose.msra.mxu0 %v846
        %864 = vmatmul.f32.gmra.mxu0 %v843
        %v865 = vpop.f32.mrf.mxu0
        %v866 = vadd.f32 0.0, %v865
        %867 = vdwg.mxu0
        %v868 = vsel %vm841, %v866, -inf
        %869 = vmax.xlane.f32.xlu0 %v868
        %v870 = vpop.xlane.xlu0 %869
        %v871 = vsub.f32 %v866, %v870
        %v872 = vmul.f32 %v871, 1.442695
        %v873 = vpow.pop %v872
        %v874 = vsel %vm841, %v873, 0.0
        %875 = vadd.xlane.f32.xlu0 %v874
        %v876 = vpop.xlane.xlu0 %875
        %v877 = vrcp.pop %v876
        %v878 = vmul.f32 %v873, %v877
        %v880 = vsel %vm841, %v878, 0
        %882 = vmatpush.msra.mxu0 0.0
        %883 = vmatpush.msra.mxu0 0.0
        %884 = vmatpush.msra.mxu0 0.0
        %885 = vmatpush.msra.mxu0 0.0
        %886 = vmatpush.msra.mxu0 0.0
        %887 = vmatpush.msra.mxu0 0.0
        %888 = vmatpush.msra.mxu0 0.0
        %889 = vmatpush.msra.mxu0 0.0
        %890 = vmatpush.msra.mxu0 0.0
        %891 = vmatpush.msra.mxu0 0.0
        %892 = vmatpush.msra.mxu0 0.0
        %893 = vmatpush.msra.mxu0 0.0
        %894 = vmatpush.msra.mxu0 0.0
        %895 = vmatpush.msra.mxu0 0.0
        %896 = vmatpush.msra.mxu0 0.0
        %897 = vmatpush.msra.mxu0 %v839
        %898 = vmatmul.f32.gmra.mxu0 %v880
        %v899 = vpop.f32.mrf.mxu0
        %v900 = vadd.f32 0.0, %v899
        %901 = vdwg.mxu0
        %902 = vrot.lane.b32.xlu0 %v780, 120
        %v903 = vpop.permute.xlu0 %902
        %904 = vrot.lane.b32.xlu0 %v809, 120
        %v905 = vpop.permute.xlu0 %904
        %v906 = vsel %vm841, %v903, 0
        %v908 = vsel %vm841, %v905, 0
        %910 = vmatpush.xpose.msra.mxu0 0.0
        %911 = vmatpush.xpose.msra.mxu0 0.0
        %912 = vmatpush.xpose.msra.mxu0 0.0
        %913 = vmatpush.xpose.msra.mxu0 0.0
        %914 = vmatpush.xpose.msra.mxu0 0.0
        %915 = vmatpush.xpose.msra.mxu0 0.0
        %916 = vmatpush.xpose.msra.mxu0 0.0
        %917 = vmatpush.xpose.msra.mxu0 0.0
        %918 = vmatpush.xpose.msra.mxu0 0.0
        %919 = vmatpush.xpose.msra.mxu0 0.0
        %920 = vmatpush.xpose.msra.mxu0 0.0
        %921 = vmatpush.xpose.msra.mxu0 0.0
        %922 = vmatpush.xpose.msra.mxu0 0.0
        %923 = vmatpush.xpose.msra.mxu0 0.0
        %924 = vmatpush.xpose.msra.mxu0 0.0
        %925 = vmatpush.xpose.msra.mxu0 %v908
        %926 = vmatmul.f32.gmra.mxu0 %v906
        %v927 = vpop.f32.mrf.mxu0
        %v928 = vadd.f32 0.0, %v927
        %929 = vdwg.mxu0
        %v930 = vsel %vm841, %v928, -inf
        %931 = vmax.xlane.f32.xlu0 %v930
        %v932 = vpop.xlane.xlu0 %931
        %v933 = vsub.f32 %v928, %v932
        %v934 = vmul.f32 %v933, 1.442695
        %v935 = vpow.pop %v934
        %v936 = vsel %vm841, %v935, 0.0
        %937 = vadd.xlane.f32.xlu0 %v936
        %v938 = vpop.xlane.xlu0 %937
        %v939 = vrcp.pop %v938
        %v940 = vmul.f32 %v935, %v939
        %942 = vrot.lane.b32.xlu0 %v839, 120
        %v943 = vpop.permute.xlu0 %942
        %v946 = vsel %vm841, %v940, 0
        %948 = vmatpush.msra.mxu0 0.0
        %949 = vmatpush.msra.mxu0 0.0
        %950 = vmatpush.msra.mxu0 0.0
        %951 = vmatpush.msra.mxu0 0.0
        %952 = vmatpush.msra.mxu0 0.0
        %953 = vmatpush.msra.mxu0 0.0
        %954 = vmatpush.msra.mxu0 0.0
        %955 = vmatpush.msra.mxu0 0.0
        %956 = vmatpush.msra.mxu0 0.0
        %957 = vmatpush.msra.mxu0 0.0
        %958 = vmatpush.msra.mxu0 0.0
        %959 = vmatpush.msra.mxu0 0.0
        %960 = vmatpush.msra.mxu0 0.0
        %961 = vmatpush.msra.mxu0 0.0
        %962 = vmatpush.msra.mxu0 0.0
        %963 = vmatpush.msra.mxu0 %v943
        %964 = vmatmul.f32.gmra.mxu0 %v946
        %v965 = vpop.f32.mrf.mxu0
        %v966 = vadd.f32 0.0, %v965
        %967 = vdwg.mxu0
        %968 = vrot.lane.b32.xlu0 %v780, 112
        %v969 = vpop.permute.xlu0 %968
        %970 = vrot.lane.b32.xlu0 %v809, 112
        %v971 = vpop.permute.xlu0 %970
        %v972 = vsel %vm841, %v969, 0
        %v974 = vsel %vm841, %v971, 0
        %976 = vmatpush.xpose.msra.mxu0 0.0
        %977 = vmatpush.xpose.msra.mxu0 0.0
        %978 = vmatpush.xpose.msra.mxu0 0.0
        %979 = vmatpush.xpose.msra.mxu0 0.0
        %980 = vmatpush.xpose.msra.mxu0 0.0
        %981 = vmatpush.xpose.msra.mxu0 0.0
        %982 = vmatpush.xpose.msra.mxu0 0.0
        %983 = vmatpush.xpose.msra.mxu0 0.0
        %984 = vmatpush.xpose.msra.mxu0 0.0
        %985 = vmatpush.xpose.msra.mxu0 0.0
        %986 = vmatpush.xpose.msra.mxu0 0.0
        %987 = vmatpush.xpose.msra.mxu0 0.0
        %988 = vmatpush.xpose.msra.mxu0 0.0
        %989 = vmatpush.xpose.msra.mxu0 0.0
        %990 = vmatpush.xpose.msra.mxu0 0.0
        %991 = vmatpush.xpose.msra.mxu0 %v974
        %992 = vmatmul.f32.gmra.mxu0 %v972
        %v993 = vpop.f32.mrf.mxu0
        %v994 = vadd.f32 0.0, %v993
        %995 = vdwg.mxu0
        %v996 = vsel %vm841, %v994, -inf
        %997 = vmax.xlane.f32.xlu0 %v996
        %v998 = vpop.xlane.xlu0 %997
        %v999 = vsub.f32 %v994, %v998
        %v1000 = vmul.f32 %v999, 1.442695
        %v1001 = vpow.pop %v1000
        %v1002 = vsel %vm841, %v1001, 0.0
        %1003 = vadd.xlane.f32.xlu0 %v1002
        %v1004 = vpop.xlane.xlu0 %1003
        %v1005 = vrcp.pop %v1004
        %v1006 = vmul.f32 %v1001, %v1005
        %1007 = vrot.lane.b32.xlu0 %v839, 112
        %v1008 = vpop.permute.xlu0 %1007
        %v1011 = vsel %vm841, %v1006, 0
        %1013 = vmatpush.msra.mxu0 0.0
        %1014 = vmatpush.msra.mxu0 0.0
        %1015 = vmatpush.msra.mxu0 0.0
        %1016 = vmatpush.msra.mxu0 0.0
        %1017 = vmatpush.msra.mxu0 0.0
        %1018 = vmatpush.msra.mxu0 0.0
        %1019 = vmatpush.msra.mxu0 0.0
        %1020 = vmatpush.msra.mxu0 0.0
        %1021 = vmatpush.msra.mxu0 0.0
        %1022 = vmatpush.msra.mxu0 0.0
        %1023 = vmatpush.msra.mxu0 0.0
        %1024 = vmatpush.msra.mxu0 0.0
        %1025 = vmatpush.msra.mxu0 0.0
        %1026 = vmatpush.msra.mxu0 0.0
        %1027 = vmatpush.msra.mxu0 0.0
        %1028 = vmatpush.msra.mxu0 %v1008
        %1029 = vmatmul.f32.gmra.mxu0 %v1011
        %v1030 = vpop.f32.mrf.mxu0
        %v1031 = vadd.f32 0.0, %v1030
        %1032 = vdwg.mxu0
        %1033 = vrot.lane.b32.xlu0 %v780, 104
        %v1034 = vpop.permute.xlu0 %1033
        %1035 = vrot.lane.b32.xlu0 %v809, 104
        %v1036 = vpop.permute.xlu0 %1035
        %v1037 = vsel %vm841, %v1034, 0
        %v1039 = vsel %vm841, %v1036, 0
        %1041 = vmatpush.xpose.msra.mxu0 0.0
        %1042 = vmatpush.xpose.msra.mxu0 0.0
        %1043 = vmatpush.xpose.msra.mxu0 0.0
        %1044 = vmatpush.xpose.msra.mxu0 0.0
        %1045 = vmatpush.xpose.msra.mxu0 0.0
        %1046 = vmatpush.xpose.msra.mxu0 0.0
        %1047 = vmatpush.xpose.msra.mxu0 0.0
        %1048 = vmatpush.xpose.msra.mxu0 0.0
        %1049 = vmatpush.xpose.msra.mxu0 0.0
        %1050 = vmatpush.xpose.msra.mxu0 0.0
        %1051 = vmatpush.xpose.msra.mxu0 0.0
        %1052 = vmatpush.xpose.msra.mxu0 0.0
        %1053 = vmatpush.xpose.msra.mxu0 0.0
        %1054 = vmatpush.xpose.msra.mxu0 0.0
        %1055 = vmatpush.xpose.msra.mxu0 0.0
        %1056 = vmatpush.xpose.msra.mxu0 %v1039
        %1057 = vmatmul.f32.gmra.mxu0 %v1037
        %v1058 = vpop.f32.mrf.mxu0
        %v1059 = vadd.f32 0.0, %v1058
        %1060 = vdwg.mxu0
        %v1061 = vsel %vm841, %v1059, -inf
        %1062 = vmax.xlane.f32.xlu0 %v1061
        %v1063 = vpop.xlane.xlu0 %1062
        %v1064 = vsub.f32 %v1059, %v1063
        %v1065 = vmul.f32 %v1064, 1.442695
        %v1066 = vpow.pop %v1065
        %v1067 = vsel %vm841, %v1066, 0.0
        %1068 = vadd.xlane.f32.xlu0 %v1067
        %v1069 = vpop.xlane.xlu0 %1068
        %v1070 = vrcp.pop %v1069
        %v1071 = vmul.f32 %v1066, %v1070
        %1072 = vrot.lane.b32.xlu0 %v839, 104
        %v1073 = vpop.permute.xlu0 %1072
        %v1076 = vsel %vm841, %v1071, 0
        %1078 = vmatpush.msra.mxu0 0.0
        %1079 = vmatpush.msra.mxu0 0.0
        %1080 = vmatpush.msra.mxu0 0.0
        %1081 = vmatpush.msra.mxu0 0.0
        %1082 = vmatpush.msra.mxu0 0.0
        %1083 = vmatpush.msra.mxu0 0.0
        %1084 = vmatpush.msra.mxu0 0.0
        %1085 = vmatpush.msra.mxu0 0.0
        %1086 = vmatpush.msra.mxu0 0.0
        %1087 = vmatpush.msra.mxu0 0.0
        %1088 = vmatpush.msra.mxu0 0.0
        %1089 = vmatpush.msra.mxu0 0.0
        %1090 = vmatpush.msra.mxu0 0.0
        %1091 = vmatpush.msra.mxu0 0.0
        %1092 = vmatpush.msra.mxu0 0.0
        %1093 = vmatpush.msra.mxu0 %v1073
        %1094 = vmatmul.f32.gmra.mxu0 %v1076
        %v1095 = vpop.f32.mrf.mxu0
        %v1096 = vadd.f32 0.0, %v1095
        %1097 = vdwg.mxu0
        %1099 = vrot.lane.b32.xlu0 %v966, 8
        %v1100 = vpop.permute.xlu0 %1099
        %1103 = vrot.lane.b32.xlu0 %v1031, 16
        %v1104 = vpop.permute.xlu0 %1103
        %1107 = vrot.lane.b32.xlu0 %v1096, 24
        %v1108 = vpop.permute.xlu0 %1107
        %v1110 = vsel %vm841, %v900, %v1100
        %vm1111 = vcmask 130048
        %v1112 = vsel %vm1111, %v1110, %v1104
        %vm1113 = vcmask 195584
        %v1114 = vsel %vm1113, %v1112, %v1108
        %v1115 = vld [vmem:[#allocation10] sm:$0xff]
        %v1116 = vld [vmem:[#allocation10 + $0x8] sm:$0xff]
        %v1117 = vld [vmem:[#allocation10 + $0x10] sm:$0xff]
        %v1118 = vld [vmem:[#allocation10 + $0x18] sm:$0xff]
        %v1119 = vld [vmem:[%s5] sm:$0x1]
        %v1121 = vperm.slane %v1119, 0
        %v1124 = vsel %vm756, %v1114, 0
        %1126 = vmatpush.msra.mxu0 0.0
        %1127 = vmatpush.msra.mxu0 0.0
        %1128 = vmatpush.msra.mxu0 0.0
        %1129 = vmatpush.msra.mxu0 0.0
        %1130 = vmatpush.msra.mxu0 0.0
        %1131 = vmatpush.msra.mxu0 0.0
        %1132 = vmatpush.msra.mxu0 0.0
        %1133 = vmatpush.msra.mxu0 0.0
        %1134 = vmatpush.msra.mxu0 0.0
        %1135 = vmatpush.msra.mxu0 0.0
        %1136 = vmatpush.msra.mxu0 0.0
        %1137 = vmatpush.msra.mxu0 0.0
        %1138 = vmatpush.msra.mxu0 %v1118
        %1139 = vmatpush.msra.mxu0 %v1117
        %1140 = vmatpush.msra.mxu0 %v1116
        %1141 = vmatpush.msra.mxu0 %v1115
        %1142 = vmatmul.f32.gmra.mxu0 %v1124
        %v1143 = vpop.f32.mrf.mxu0
        %v1144 = vadd.f32 %v1121, %v1143
        %1145 = vdwg.mxu0
        %v1146 = vadd.f32 %v747, %v1144
        %v1147 = vld [vmem:[%s10] sm:$0x1]
        %v1148 = vld [vmem:[%s11] sm:$0x1]
        %v1149 = vsel %vm756, %v1146, 0.0
        %1150 = vadd.xlane.f32.xlu0 %v1149
        %v1151 = vpop.xlane.xlu0 %1150
        %v1152 = vrcp.pop 32.0
        %v1153 = vmul.f32 32.0, %v1152
        %v1154 = vsub.f32 1.0, %v1153
        %v1155 = vmul.f32 %v1152, %v1154
        %v1156 = vadd.f32 %v1152, %v1155
        %vm1157 = vweird.f32 %v1152
        %v1158 = vsel %vm1157, %v1152, %v1156
        %v1159 = vmul.f32 %v1151, %v1158
        %v1160 = vsub.f32 %v1146, %v1159
        %v1161 = vmul.f32 %v1160, %v1160
        %v1162 = vsel %vm756, %v1161, 0.0
        %1163 = vadd.xlane.f32.xlu0 %v1162
        %v1164 = vpop.xlane.xlu0 %1163
        %v1165 = vmul.f32 %v1164, %v1158
        %v1166 = vadd.f32 %v1165, 1e-05
        %v1167 = vrsqrt.pop %v1166
        %v1168 = vmul.f32 %v1167, %v1166
        %v1169 = vmul.f32 %v1168, %v1167
        %v1170 = vmul.f32 0.5, %v1169
        %v1171 = vsub.f32 1.5, %v1170
        %v1172 = vmul.f32 %v1167, %v1171
        %vm1173 = vweird.f32 %v1166
        %vm1174 = vweird.f32 %v1167
        %vm1175 = vmor %vm1173, %vm1174
        %v1176 = vsel %vm1175, %v1167, %v1172
        %v1177 = vmul.f32 %v1160, %v1176
        %v1179 = vperm.slane %v1147, 0
        %v1181 = vmul.f32 %v1177, %v1179
        %v1183 = vperm.slane %v1148, 0
        %v1185 = vadd.f32 %v1181, %v1183
        %v1186 = vld [vmem:[%s653] sm:$0xff]
        %v1187 = vld [vmem:[#allocation11] sm:$0xff]
        %v1188 = vld [vmem:[#allocation11 + $0x8] sm:$0xff]
        %v1189 = vld [vmem:[#allocation11 + $0x10] sm:$0xff]
        %v1190 = vld [vmem:[#allocation11 + $0x18] sm:$0xff]
        %v1191 = vld [vmem:[%s7] sm:$0x1]
        %v1193 = vrot.slane %v1185, 7
        %v1194 = vsel %vm756, %v1193, 0
        %1196 = vmatpush.msra.mxu0 0.0
        %1197 = vmatpush.msra.mxu0 0.0
        %1198 = vmatpush.msra.mxu0 0.0
        %1199 = vmatpush.msra.mxu0 0.0
        %1200 = vmatpush.msra.mxu0 0.0
        %1201 = vmatpush.msra.mxu0 0.0
        %1202 = vmatpush.msra.mxu0 0.0
        %1203 = vmatpush.msra.mxu0 0.0
        %1204 = vmatpush.msra.mxu0 0.0
        %1205 = vmatpush.msra.mxu0 0.0
        %1206 = vmatpush.msra.mxu0 0.0
        %1207 = vmatpush.msra.mxu0 0.0
        %1208 = vmatpush.msra.mxu0 %v1190
        %1209 = vmatpush.msra.mxu0 %v1189
        %1210 = vmatpush.msra.mxu0 %v1188
        %1211 = vmatpush.msra.mxu0 %v1187
        %1212 = vmatmul.f32.gmra.mxu0 %v1194
        %v1213 = vpop.f32.mrf.mxu0
        %v1214 = vadd.f32 %v1191, %v1213
        %1215 = vdwg.mxu0
        %v1216 = vmul.f32 %v1214, 0.35355338
        %s1217 = scalar_lea.vmem [#allocation11], 32
        %v1218 = vld [vmem:[%s1217] sm:$0xff]
        %v1219 = vld [vmem:[%s1217 + $0x8] sm:$0xff]
        %v1220 = vld [vmem:[%s1217 + $0x10] sm:$0xff]
        %v1221 = vld [vmem:[%s1217 + $0x18] sm:$0xff]
        %s1222 = scalar_lea.vmem %s7, 1
        %v1223 = vld [vmem:[%s1222] sm:$0x1]
        %v1225 = vperm.slane %v1223, 0
        %v1228 = vsel %vm756, %v1186, 0
        %1230 = vmatpush.msra.mxu0 0.0
        %1231 = vmatpush.msra.mxu0 0.0
        %1232 = vmatpush.msra.mxu0 0.0
        %1233 = vmatpush.msra.mxu0 0.0
        %1234 = vmatpush.msra.mxu0 0.0
        %1235 = vmatpush.msra.mxu0 0.0
        %1236 = vmatpush.msra.mxu0 0.0
        %1237 = vmatpush.msra.mxu0 0.0
        %1238 = vmatpush.msra.mxu0 0.0
        %1239 = vmatpush.msra.mxu0 0.0
        %1240 = vmatpush.msra.mxu0 0.0
        %1241 = vmatpush.msra.mxu0 0.0
        %1242 = vmatpush.msra.mxu0 %v1221
        %1243 = vmatpush.msra.mxu0 %v1220
        %1244 = vmatpush.msra.mxu0 %v1219
        %1245 = vmatpush.msra.mxu0 %v1218
        %1246 = vmatmul.f32.gmra.mxu0 %v1228
        %v1247 = vpop.f32.mrf.mxu0
        %v1248 = vadd.f32 %v1225, %v1247
        %1249 = vdwg.mxu0
        %s1250 = scalar_lea.vmem [#allocation11], 64
        %v1251 = vld [vmem:[%s1250] sm:$0xff]
        %v1252 = vld [vmem:[%s1250 + $0x8] sm:$0xff]
        %v1253 = vld [vmem:[%s1250 + $0x10] sm:$0xff]
        %v1254 = vld [vmem:[%s1250 + $0x18] sm:$0xff]
        %s1255 = scalar_lea.vmem %s7, 2
        %v1256 = vld [vmem:[%s1255] sm:$0x1]
        %v1258 = vperm.slane %v1256, 0
        %1260 = vmatpush.msra.mxu0 0.0
        %1261 = vmatpush.msra.mxu0 0.0
        %1262 = vmatpush.msra.mxu0 0.0
        %1263 = vmatpush.msra.mxu0 0.0
        %1264 = vmatpush.msra.mxu0 0.0
        %1265 = vmatpush.msra.mxu0 0.0
        %1266 = vmatpush.msra.mxu0 0.0
        %1267 = vmatpush.msra.mxu0 0.0
        %1268 = vmatpush.msra.mxu0 0.0
        %1269 = vmatpush.msra.mxu0 0.0
        %1270 = vmatpush.msra.mxu0 0.0
        %1271 = vmatpush.msra.mxu0 0.0
        %1272 = vmatpush.msra.mxu0 %v1254
        %1273 = vmatpush.msra.mxu0 %v1253
        %1274 = vmatpush.msra.mxu0 %v1252
        %1275 = vmatpush.msra.mxu0 %v1251
        %1276 = vmatmul.f32.gmra.mxu0 %v1228
        %v1277 = vpop.f32.mrf.mxu0
        %v1278 = vadd.f32 %v1258, %v1277
        %1279 = vdwg.mxu0
        %v1281 = vsel %vm841, %v1216, 0
        %v1284 = vsel %vm841, %v1248, 0
        %1286 = vmatpush.xpose.msra.mxu0 0.0
        %1287 = vmatpush.xpose.msra.mxu0 0.0
        %1288 = vmatpush.xpose.msra.mxu0 0.0
        %1289 = vmatpush.xpose.msra.mxu0 0.0
        %1290 = vmatpush.xpose.msra.mxu0 0.0
        %1291 = vmatpush.xpose.msra.mxu0 0.0
        %1292 = vmatpush.xpose.msra.mxu0 0.0
        %1293 = vmatpush.xpose.msra.mxu0 0.0
        %1294 = vmatpush.xpose.msra.mxu0 0.0
        %1295 = vmatpush.xpose.msra.mxu0 0.0
        %1296 = vmatpush.xpose.msra.mxu0 0.0
        %1297 = vmatpush.xpose.msra.mxu0 0.0
        %1298 = vmatpush.xpose.msra.mxu0 0.0
        %1299 = vmatpush.xpose.msra.mxu0 0.0
        %1300 = vmatpush.xpose.msra.mxu0 0.0
        %1301 = vmatpush.xpose.msra.mxu0 %v1284
        %1302 = vmatmul.f32.gmra.mxu0 %v1281
        %v1303 = vpop.f32.mrf.mxu0
        %v1304 = vadd.f32 0.0, %v1303
        %1305 = vdwg.mxu0
        %vm1306 = vcmask 57344
        %v1307 = vsel %vm1306, %v1304, -inf
        %1308 = vmax.xlane.f32.xlu0 %v1307
        %v1309 = vpop.xlane.xlu0 %1308
        %v1310 = vsub.f32 %v1304, %v1309
        %v1311 = vmul.f32 %v1310, 1.442695
        %v1312 = vpow.pop %v1311
        %v1313 = vsel %vm1306, %v1312, 0.0
        %1314 = vadd.xlane.f32.xlu0 %v1313
        %v1315 = vpop.xlane.xlu0 %1314
        %v1316 = vrcp.pop %v1315
        %v1317 = vmul.f32 %v1312, %v1316
        %v1319 = vsel %vm841, %v1317, 0
        %1321 = vmatpush.msra.mxu0 0.0
        %1322 = vmatpush.msra.mxu0 0.0
        %1323 = vmatpush.msra.mxu0 0.0
        %1324 = vmatpush.msra.mxu0 0.0
        %1325 = vmatpush.msra.mxu0 0.0
        %1326 = vmatpush.msra.mxu0 0.0
        %1327 = vmatpush.msra.mxu0 0.0
        %1328 = vmatpush.msra.mxu0 0.0
        %1329 = vmatpush.msra.mxu0 0.0
        %1330 = vmatpush.msra.mxu0 0.0
        %1331 = vmatpush.msra.mxu0 0.0
        %1332 = vmatpush.msra.mxu0 0.0
        %1333 = vmatpush.msra.mxu0 0.0
        %1334 = vmatpush.msra.mxu0 0.0
        %1335 = vmatpush.msra.mxu0 0.0
        %1336 = vmatpush.msra.mxu0 %v1278
        %1337 = vmatmul.f32.gmra.mxu0 %v1319
        %v1338 = vpop.f32.mrf.mxu0
        %v1339 = vadd.f32 0.0, %v1338
        %1340 = vdwg.mxu0
        %1341 = vrot.lane.b32.xlu0 %v1216, 120
        %v1342 = vpop.permute.xlu0 %1341
        %1343 = vrot.lane.b32.xlu0 %v1248, 120
        %v1344 = vpop.permute.xlu0 %1343
        %v1345 = vsel %vm841, %v1342, 0
        %v1347 = vsel %vm841, %v1344, 0
        %1349 = vmatpush.xpose.msra.mxu0 0.0
        %1350 = vmatpush.xpose.msra.mxu0 0.0
        %1351 = vmatpush.xpose.msra.mxu0 0.0
        %1352 = vmatpush.xpose.msra.mxu0 0.0
        %1353 = vmatpush.xpose.msra.mxu0 0.0
        %1354 = vmatpush.xpose.msra.mxu0 0.0
        %1355 = vmatpush.xpose.msra.mxu0 0.0
        %1356 = vmatpush.xpose.msra.mxu0 0.0
        %1357 = vmatpush.xpose.msra.mxu0 0.0
        %1358 = vmatpush.xpose.msra.mxu0 0.0
        %1359 = vmatpush.xpose.msra.mxu0 0.0
        %1360 = vmatpush.xpose.msra.mxu0 0.0
        %1361 = vmatpush.xpose.msra.mxu0 0.0
        %1362 = vmatpush.xpose.msra.mxu0 0.0
        %1363 = vmatpush.xpose.msra.mxu0 0.0
        %1364 = vmatpush.xpose.msra.mxu0 %v1347
        %1365 = vmatmul.f32.gmra.mxu0 %v1345
        %v1366 = vpop.f32.mrf.mxu0
        %v1367 = vadd.f32 0.0, %v1366
        %1368 = vdwg.mxu0
        %v1369 = vsel %vm1306, %v1367, -inf
        %1370 = vmax.xlane.f32.xlu0 %v1369
        %v1371 = vpop.xlane.xlu0 %1370
        %v1372 = vsub.f32 %v1367, %v1371
        %v1373 = vmul.f32 %v1372, 1.442695
        %v1374 = vpow.pop %v1373
        %v1375 = vsel %vm1306, %v1374, 0.0
        %1376 = vadd.xlane.f32.xlu0 %v1375
        %v1377 = vpop.xlane.xlu0 %1376
        %v1378 = vrcp.pop %v1377
        %v1379 = vmul.f32 %v1374, %v1378
        %1381 = vrot.lane.b32.xlu0 %v1278, 120
        %v1382 = vpop.permute.xlu0 %1381
        %v1385 = vsel %vm841, %v1379, 0
        %1387 = vmatpush.msra.mxu0 0.0
        %1388 = vmatpush.msra.mxu0 0.0
        %1389 = vmatpush.msra.mxu0 0.0
        %1390 = vmatpush.msra.mxu0 0.0
        %1391 = vmatpush.msra.mxu0 0.0
        %1392 = vmatpush.msra.mxu0 0.0
        %1393 = vmatpush.msra.mxu0 0.0
        %1394 = vmatpush.msra.mxu0 0.0
        %1395 = vmatpush.msra.mxu0 0.0
        %1396 = vmatpush.msra.mxu0 0.0
        %1397 = vmatpush.msra.mxu0 0.0
        %1398 = vmatpush.msra.mxu0 0.0
        %1399 = vmatpush.msra.mxu0 0.0
        %1400 = vmatpush.msra.mxu0 0.0
        %1401 = vmatpush.msra.mxu0 0.0
        %1402 = vmatpush.msra.mxu0 %v1382
        %1403 = vmatmul.f32.gmra.mxu0 %v1385
        %v1404 = vpop.f32.mrf.mxu0
        %v1405 = vadd.f32 0.0, %v1404
        %1406 = vdwg.mxu0
        %1407 = vrot.lane.b32.xlu0 %v1216, 112
        %v1408 = vpop.permute.xlu0 %1407
        %1409 = vrot.lane.b32.xlu0 %v1248, 112
        %v1410 = vpop.permute.xlu0 %1409
        %v1411 = vsel %vm841, %v1408, 0
        %v1413 = vsel %vm841, %v1410, 0
        %1415 = vmatpush.xpose.msra.mxu0 0.0
        %1416 = vmatpush.xpose.msra.mxu0 0.0
        %1417 = vmatpush.xpose.msra.mxu0 0.0
        %1418 = vmatpush.xpose.msra.mxu0 0.0
        %1419 = vmatpush.xpose.msra.mxu0 0.0
        %1420 = vmatpush.xpose.msra.mxu0 0.0
        %1421 = vmatpush.xpose.msra.mxu0 0.0
        %1422 = vmatpush.xpose.msra.mxu0 0.0
        %1423 = vmatpush.xpose.msra.mxu0 0.0
        %1424 = vmatpush.xpose.msra.mxu0 0.0
        %1425 = vmatpush.xpose.msra.mxu0 0.0
        %1426 = vmatpush.xpose.msra.mxu0 0.0
        %1427 = vmatpush.xpose.msra.mxu0 0.0
        %1428 = vmatpush.xpose.msra.mxu0 0.0
        %1429 = vmatpush.xpose.msra.mxu0 0.0
        %1430 = vmatpush.xpose.msra.mxu0 %v1413
        %1431 = vmatmul.f32.gmra.mxu0 %v1411
        %v1432 = vpop.f32.mrf.mxu0
        %v1433 = vadd.f32 0.0, %v1432
        %1434 = vdwg.mxu0
        %v1435 = vsel %vm1306, %v1433, -inf
        %1436 = vmax.xlane.f32.xlu0 %v1435
        %v1437 = vpop.xlane.xlu0 %1436
        %v1438 = vsub.f32 %v1433, %v1437
        %v1439 = vmul.f32 %v1438, 1.442695
        %v1440 = vpow.pop %v1439
        %v1441 = vsel %vm1306, %v1440, 0.0
        %1442 = vadd.xlane.f32.xlu0 %v1441
        %v1443 = vpop.xlane.xlu0 %1442
        %v1444 = vrcp.pop %v1443
        %v1445 = vmul.f32 %v1440, %v1444
        %1446 = vrot.lane.b32.xlu0 %v1278, 112
        %v1447 = vpop.permute.xlu0 %1446
        %v1450 = vsel %vm841, %v1445, 0
        %1452 = vmatpush.msra.mxu0 0.0
        %1453 = vmatpush.msra.mxu0 0.0
        %1454 = vmatpush.msra.mxu0 0.0
        %1455 = vmatpush.msra.mxu0 0.0
        %1456 = vmatpush.msra.mxu0 0.0
        %1457 = vmatpush.msra.mxu0 0.0
        %1458 = vmatpush.msra.mxu0 0.0
        %1459 = vmatpush.msra.mxu0 0.0
        %1460 = vmatpush.msra.mxu0 0.0
        %1461 = vmatpush.msra.mxu0 0.0
        %1462 = vmatpush.msra.mxu0 0.0
        %1463 = vmatpush.msra.mxu0 0.0
        %1464 = vmatpush.msra.mxu0 0.0
        %1465 = vmatpush.msra.mxu0 0.0
        %1466 = vmatpush.msra.mxu0 0.0
        %1467 = vmatpush.msra.mxu0 %v1447
        %1468 = vmatmul.f32.gmra.mxu0 %v1450
        %v1469 = vpop.f32.mrf.mxu0
        %v1470 = vadd.f32 0.0, %v1469
        %1471 = vdwg.mxu0
        %1472 = vrot.lane.b32.xlu0 %v1216, 104
        %v1473 = vpop.permute.xlu0 %1472
        %1474 = vrot.lane.b32.xlu0 %v1248, 104
        %v1475 = vpop.permute.xlu0 %1474
        %v1476 = vsel %vm841, %v1473, 0
        %v1478 = vsel %vm841, %v1475, 0
        %1480 = vmatpush.xpose.msra.mxu0 0.0
        %1481 = vmatpush.xpose.msra.mxu0 0.0
        %1482 = vmatpush.xpose.msra.mxu0 0.0
        %1483 = vmatpush.xpose.msra.mxu0 0.0
        %1484 = vmatpush.xpose.msra.mxu0 0.0
        %1485 = vmatpush.xpose.msra.mxu0 0.0
        %1486 = vmatpush.xpose.msra.mxu0 0.0
        %1487 = vmatpush.xpose.msra.mxu0 0.0
        %1488 = vmatpush.xpose.msra.mxu0 0.0
        %1489 = vmatpush.xpose.msra.mxu0 0.0
        %1490 = vmatpush.xpose.msra.mxu0 0.0
        %1491 = vmatpush.xpose.msra.mxu0 0.0
        %1492 = vmatpush.xpose.msra.mxu0 0.0
        %1493 = vmatpush.xpose.msra.mxu0 0.0
        %1494 = vmatpush.xpose.msra.mxu0 0.0
        %1495 = vmatpush.xpose.msra.mxu0 %v1478
        %1496 = vmatmul.f32.gmra.mxu0 %v1476
        %v1497 = vpop.f32.mrf.mxu0
        %v1498 = vadd.f32 0.0, %v1497
        %1499 = vdwg.mxu0
        %v1500 = vsel %vm1306, %v1498, -inf
        %1501 = vmax.xlane.f32.xlu0 %v1500
        %v1502 = vpop.xlane.xlu0 %1501
        %v1503 = vsub.f32 %v1498, %v1502
        %v1504 = vmul.f32 %v1503, 1.442695
        %v1505 = vpow.pop %v1504
        %v1506 = vsel %vm1306, %v1505, 0.0
        %1507 = vadd.xlane.f32.xlu0 %v1506
        %v1508 = vpop.xlane.xlu0 %1507
        %v1509 = vrcp.pop %v1508
        %v1510 = vmul.f32 %v1505, %v1509
        %1511 = vrot.lane.b32.xlu0 %v1278, 104
        %v1512 = vpop.permute.xlu0 %1511
        %v1515 = vsel %vm841, %v1510, 0
        %1517 = vmatpush.msra.mxu0 0.0
        %1518 = vmatpush.msra.mxu0 0.0
        %1519 = vmatpush.msra.mxu0 0.0
        %1520 = vmatpush.msra.mxu0 0.0
        %1521 = vmatpush.msra.mxu0 0.0
        %1522 = vmatpush.msra.mxu0 0.0
        %1523 = vmatpush.msra.mxu0 0.0
        %1524 = vmatpush.msra.mxu0 0.0
        %1525 = vmatpush.msra.mxu0 0.0
        %1526 = vmatpush.msra.mxu0 0.0
        %1527 = vmatpush.msra.mxu0 0.0
        %1528 = vmatpush.msra.mxu0 0.0
        %1529 = vmatpush.msra.mxu0 0.0
        %1530 = vmatpush.msra.mxu0 0.0
        %1531 = vmatpush.msra.mxu0 0.0
        %1532 = vmatpush.msra.mxu0 %v1512
        %1533 = vmatmul.f32.gmra.mxu0 %v1515
        %v1534 = vpop.f32.mrf.mxu0
        %v1535 = vadd.f32 0.0, %v1534
        %1536 = vdwg.mxu0
        %1538 = vrot.lane.b32.xlu0 %v1405, 8
        %v1539 = vpop.permute.xlu0 %1538
        %1542 = vrot.lane.b32.xlu0 %v1470, 16
        %v1543 = vpop.permute.xlu0 %1542
        %1546 = vrot.lane.b32.xlu0 %v1535, 24
        %v1547 = vpop.permute.xlu0 %1546
        %v1549 = vsel %vm841, %v1339, %v1539
        %v1550 = vsel %vm1111, %v1549, %v1543
        %v1551 = vsel %vm1113, %v1550, %v1547
        %v1552 = vld [vmem:[#allocation13] sm:$0xff]
        %v1553 = vld [vmem:[#allocation13 + $0x8] sm:$0xff]
        %v1554 = vld [vmem:[#allocation13 + $0x10] sm:$0xff]
        %v1555 = vld [vmem:[#allocation13 + $0x18] sm:$0xff]
        %v1556 = vld [vmem:[%s9] sm:$0x1]
        %v1558 = vsel %vm756, %v1551, 0
        %1560 = vmatpush.msra.mxu0 0.0
        %1561 = vmatpush.msra.mxu0 0.0
        %1562 = vmatpush.msra.mxu0 0.0
        %1563 = vmatpush.msra.mxu0 0.0
        %1564 = vmatpush.msra.mxu0 0.0
        %1565 = vmatpush.msra.mxu0 0.0
        %1566 = vmatpush.msra.mxu0 0.0
        %1567 = vmatpush.msra.mxu0 0.0
        %1568 = vmatpush.msra.mxu0 0.0
        %1569 = vmatpush.msra.mxu0 0.0
        %1570 = vmatpush.msra.mxu0 0.0
        %1571 = vmatpush.msra.mxu0 0.0
        %1572 = vmatpush.msra.mxu0 %v1555
        %1573 = vmatpush.msra.mxu0 %v1554
        %1574 = vmatpush.msra.mxu0 %v1553
        %1575 = vmatpush.msra.mxu0 %v1552
        %1576 = vmatmul.f32.gmra.mxu0 %v1558
        %v1577 = vpop.f32.mrf.mxu0
        %v1578 = vadd.f32 %v1556, %v1577
        %1579 = vdwg.mxu0
        %v1581 = vrot.slane %v1578, 1
        %v1583 = vadd.f32 %v1185, %v1581
        %vm1584 = vcmask 261127
        %v1585 = vsel %vm1584, %v1583, 0.0
        %1586 = vadd.xlane.f32.xlu0 %v1585
        %v1587 = vpop.xlane.xlu0 %1586
        %v1588 = vmul.f32 %v1587, %v1158
        %v1589 = vsub.f32 %v1583, %v1588
        %v1590 = vmul.f32 %v1589, %v1589
        %v1591 = vsel %vm1584, %v1590, 0.0
        %1592 = vadd.xlane.f32.xlu0 %v1591
        %v1593 = vpop.xlane.xlu0 %1592
        %v1594 = vmul.f32 %v1593, %v1158
        %v1595 = vadd.f32 %v1594, 1e-05
        %v1596 = vrsqrt.pop %v1595
        %v1597 = vmul.f32 %v1596, %v1595
        %v1598 = vmul.f32 %v1597, %v1596
        %v1599 = vmul.f32 0.5, %v1598
        %v1600 = vsub.f32 1.5, %v1599
        %v1601 = vmul.f32 %v1596, %v1600
        %vm1602 = vweird.f32 %v1595
        %vm1603 = vweird.f32 %v1596
        %vm1604 = vmor %vm1602, %vm1603
        %v1605 = vsel %vm1604, %v1596, %v1601
        %v1606 = vmul.f32 %v1589, %v1605
        %v1607 = vmul.f32 %v1606, %v1179
        %v1608 = vadd.f32 %v1607, %v1183
        %v1609 = vlaneseq
        %v1610 = vshrl.u32 %v1609, 7
        %v1611 = vperm.slane %v1608, 7
        %vm1612 = vcmp.eq.s32.totalorder %v1610, 7
        %v1613 = vsel %vm1612, %v1611, %v1185
        %v1614 = vld [vmem:[%s12] sm:$0x1]
        %v1615 = vld [vmem:[%s13] sm:$0x1]
        %v1616 = vsel %vm756, %v1613, 0.0
        %1617 = vadd.xlane.f32.xlu0 %v1616
        %v1618 = vpop.xlane.xlu0 %1617
        %v1619 = vmul.f32 %v1618, %v1158
        %v1620 = vsub.f32 %v1613, %v1619
        %v1621 = vmul.f32 %v1620, %v1620
        %v1622 = vsel %vm756, %v1621, 0.0
        %1623 = vadd.xlane.f32.xlu0 %v1622
        %v1624 = vpop.xlane.xlu0 %1623
        %v1625 = vmul.f32 %v1624, %v1158
        %v1626 = vadd.f32 %v1625, 1e-05
        %v1627 = vrsqrt.pop %v1626
        %v1628 = vmul.f32 %v1627, %v1626
        %v1629 = vmul.f32 %v1628, %v1627
        %v1630 = vmul.f32 0.5, %v1629
        %v1631 = vsub.f32 1.5, %v1630
        %v1632 = vmul.f32 %v1627, %v1631
        %vm1633 = vweird.f32 %v1626
        %vm1634 = vweird.f32 %v1627
        %vm1635 = vmor %vm1633, %vm1634
        %v1636 = vsel %vm1635, %v1627, %v1632
        %v1637 = vmul.f32 %v1620, %v1636
        %v1639 = vperm.slane %v1614, 0
        %v1641 = vmul.f32 %v1637, %v1639
        %v1643 = vperm.slane %v1615, 0
        %v1645 = vadd.f32 %v1641, %v1643
        %v1646 = vld [vmem:[#allocation14] sm:$0xff]
        %v1647 = vld [vmem:[#allocation14 + $0x8] sm:$0xff]
        %v1648 = vld [vmem:[#allocation14 + $0x10] sm:$0xff]
        %v1649 = vld [vmem:[#allocation14 + $0x18] sm:$0xff]
        %v1650 = vld [vmem:[%s15] sm:$0x1]
        %v1652 = vperm.slane %v1650, 0
        %v1655 = vsel %vm756, %v1645, 0
        %1657 = vmatpush.msra.mxu0 0.0
        %1658 = vmatpush.msra.mxu0 0.0
        %1659 = vmatpush.msra.mxu0 0.0
        %1660 = vmatpush.msra.mxu0 0.0
        %1661 = vmatpush.msra.mxu0 0.0
        %1662 = vmatpush.msra.mxu0 0.0
        %1663 = vmatpush.msra.mxu0 0.0
        %1664 = vmatpush.msra.mxu0 0.0
        %1665 = vmatpush.msra.mxu0 0.0
        %1666 = vmatpush.msra.mxu0 0.0
        %1667 = vmatpush.msra.mxu0 0.0
        %1668 = vmatpush.msra.mxu0 0.0
        %1669 = vmatpush.msra.mxu0 %v1649
        %1670 = vmatpush.msra.mxu0 %v1648
        %1671 = vmatpush.msra.mxu0 %v1647
        %1672 = vmatpush.msra.mxu0 %v1646
        %1673 = vmatmul.f32.gmra.mxu0 %v1655
        %v1674 = vpop.f32.mrf.mxu0
        %v1675 = vadd.f32 %v1652, %v1674
        %1676 = vdwg.mxu0
        %v1677 = vmax.f32 %v1675, 0.0
        %v1678 = vld [vmem:[#allocation16] sm:$0xff]
        %v1679 = vld [vmem:[#allocation16 + $0x8] sm:$0xff]
        %v1680 = vld [vmem:[#allocation16 + $0x10] sm:$0xff]
        %v1681 = vld [vmem:[#allocation16 + $0x18] sm:$0xff]
        %v1682 = vld [vmem:[%s17] sm:$0x1]
        %v1684 = vperm.slane %v1682, 0
        %v1687 = vsel %vm756, %v1677, 0
        %1689 = vmatpush.msra.mxu0 0.0
        %1690 = vmatpush.msra.mxu0 0.0
        %1691 = vmatpush.msra.mxu0 0.0
        %1692 = vmatpush.msra.mxu0 0.0
        %1693 = vmatpush.msra.mxu0 0.0
        %1694 = vmatpush.msra.mxu0 0.0
        %1695 = vmatpush.msra.mxu0 0.0
        %1696 = vmatpush.msra.mxu0 0.0
        %1697 = vmatpush.msra.mxu0 0.0
        %1698 = vmatpush.msra.mxu0 0.0
        %1699 = vmatpush.msra.mxu0 0.0
        %1700 = vmatpush.msra.mxu0 0.0
        %1701 = vmatpush.msra.mxu0 %v1681
        %1702 = vmatpush.msra.mxu0 %v1680
        %1703 = vmatpush.msra.mxu0 %v1679
        %1704 = vmatpush.msra.mxu0 %v1678
        %1705 = vmatmul.f32.gmra.mxu0 %v1687
        %v1706 = vpop.f32.mrf.mxu0
        %v1707 = vadd.f32 %v1684, %v1706
        %1708 = vdwg.mxu0
        %1709 = vst.msk [vmem:[%s746] sm:$0xff] %vm756, %v1707
        %s1710 = sand.u32 %s437, 1
        %s1711 = scalar_lea.sflag [#allocation4], %s1710
        %s1712 = sand.u32 %s437, 1
        %s1713 = smul.addr %s1712, 8
        %s1714 = scalar_lea.vmem [#allocation17], %s1713
        // Predicated region
        $region129: #{tpu_custom_call.1} parent=91 // pred_check
          %p1715 = pneg %p447
        $region130: #{tpu_custom_call.1} parent=91 // pred_check_branch
          %1717 = sbr.rel (%p1715) target = $region132
        $region131: #{tpu_custom_call.1} parent=91 // pred_region
          %1719 = vsyncadd %s1711, 0
          %s1720 = smul.addr %s41, 8
          %s1721 = scalar_lea.hbm %s18, %s1720
          %s1723 = sshll.u32 %s1714, 4
          %s1724 = int_to_ptr.vmem [resolvable:$true] %s1723
          %s1725 = sshll.u32 %s1721, 4
          %s1726 = int_to_ptr.hbm [resolvable:$true] %s1725
          %1728 = dma.vmem_to_hbm [thread:$0]  %s1724, 128, %s1726, %s1711
        $region132: #{tpu_custom_call.1} parent=91 // pred_fallthru
          _
      $region92: #{tpu_custom_call.1} parent=5 // pred_fallthru
        _
      %p1729 = scmp.le.s32.totalorder 2, %s36
      // Predicated region
      $region133: #{tpu_custom_call.1} parent=5 // pred_check
        %p1730 = pneg %p1729
      $region134: #{tpu_custom_call.1} parent=5 // pred_check_branch
        %1732 = sbr.rel (%p1730) target = $region136
      $region135: #{tpu_custom_call.1} parent=5 // pred_region
        %s1733 = ssub.s32 %s36, 2
        // Predicated region
        $region137: #{tpu_custom_call.1} parent=135 // pred_check
          %p1734 = pneg %p453
        $region138: #{tpu_custom_call.1} parent=135 // pred_check_branch
          %1736 = sbr.rel (%p1734) target = $region140
        $region139: #{tpu_custom_call.1} parent=135 // pred_region
          %s1737 = sand.u32 %s438, 1
          %s1738 = scalar_lea.sflag [#allocation4], %s1737
          %s1739 = sand.u32 %s438, 1
          %s1740 = smul.addr %s1739, 8
          %s1741 = scalar_lea.vmem [#allocation17], %s1740
          %1743 = dma.done %s1738, 128
        $region140: #{tpu_custom_call.1} parent=135 // pred_fallthru
          _
      $region136: #{tpu_custom_call.1} parent=5 // pred_fallthru
        _
    $region6: #{tpu_custom_call.1} parent=1 // loop_footer
      %s40 = sadd.s32 1, %s36
    $region7: #{tpu_custom_call.1} parent=1 // loop_footer_branch
      %35 = sbr.rel target = $region3
    $region8: #{tpu_custom_call.1} parent=1 // loop_exit
      _
    %1744 = vsyncpa [#allocation3], 1
    %s1745 = scalar_lea.sflag [#allocation3], 1
    %1746 = vsyncpa %s1745, 1
    %1747 = vsyncpa [#allocation6], 1
    %s1748 = scalar_lea.sflag [#allocation6], 1
    %1749 = vsyncpa %s1748, 1
    %1750 = vsyncpa [#allocation9], 1
    %1751 = vsyncpa [#allocation12], 1
    %1752 = vsyncpa [#allocation15], 1
    %1753 = vsyncpa [#allocation4], 1
    %s1754 = scalar_lea.sflag [#allocation4], 1
    %1755 = vsyncpa %s1754, 1

</llo_original>
